<compile_context>
chip_gen: v7x
topology: tpu7x:2x2x1
jax: 0.10.0
libtpu: 0.0.40
codegen_flags: <defaults>
</compile_context>

<pallas_src>
import numpy as np
import jax
import jax.numpy as jnp
from jax.experimental import pallas as pl
from jax.experimental.pallas import tpu as pltpu


TB = 128        # samples per grid step (= lane width)
GROUP = 4       # W1 copies in the block-diagonal layer-1 weight (4*H = 128 lanes)


def _round_up(v, m):
    return ((v + m - 1) // m) * m


# ---------------------------------------------------------------------------
# Parameter packing: one (rows, 128) f32 slab, every row pre-broadcast across
# the 128 lanes (lane = sample), so the kernel only ever does sublane work.
# ---------------------------------------------------------------------------
def pack_params(params, np_pad, group=GROUP):
    W0 = np.asarray(params['W0'], np.float32)           # (1+z_dim, H)
    W1 = np.asarray(params['W1'], np.float32)           # (H_in, H_out)
    W2 = np.asarray(params['W2'], np.float32)           # (H, 1)
    b0 = np.asarray(params['b0'], np.float32)           # (1, H)
    b1 = np.asarray(params['b1'], np.float32)           # (1, H)
    b2 = np.asarray(params['b2'], np.float32)           # (1, 1)
    u_n = np.asarray(params['u_n'], np.float32)[0]      # (n,)
    w_n = np.asarray(params['w_n'], np.float32)[0]      # (n,)

    d_in, H = W0.shape
    D = d_in - 1
    n = u_n.shape[0]
    GH = group * H
    assert H % 8 == 0 and GH <= 128
    assert np_pad % 8 == 0 and np_pad % group == 0 and n <= np_pad

    offs = {}
    pos = 0

    def take(name, nrows):
        nonlocal pos
        offs[name] = pos
        pos += _round_up(nrows, 8)          # keep every section sublane-aligned

    take('hu', np_pad)          # 0.5*(1+u_j)  rows, lane-broadcast
    take('hw', np_pad)          # 0.5*w_j      rows, lane-broadcast (pad rows = 0)
    take('w0t', H)              # W0 time column,  (H, 128)
    take('w0c', D * H)          # D blocks of (H, 128): W0 covariate columns
    take('b0', H)
    take('b1', H)
    take('w2', H)
    take('b2', 1)
    take('bd', GH)              # block-diag of GROUP copies of W1^T, (GH, GH)
    rows = pos

    slab = np.zeros((rows, 128), np.float32)
    ones = np.ones((128,), np.float32)

    hu = np.full((np_pad,), 0.5, np.float32)
    hu[:n] = 0.5 * (1.0 + u_n)
    hw = np.zeros((np_pad,), np.float32)
    hw[:n] = 0.5 * w_n

    slab[offs['hu']:offs['hu'] + np_pad, :] = hu[:, None] * ones
    slab[offs['hw']:offs['hw'] + np_pad, :] = hw[:, None] * ones
    slab[offs['w0t']:offs['w0t'] + H, :] = W0[0][:, None] * ones
    for d in range(D):
        slab[offs['w0c'] + d * H:offs['w0c'] + (d + 1) * H, :] = W0[1 + d][:, None] * ones
    slab[offs['b0']:offs['b0'] + H, :] = b0[0][:, None] * ones
    slab[offs['b1']:offs['b1'] + H, :] = b1[0][:, None] * ones
    slab[offs['w2']:offs['w2'] + H, :] = W2[:, 0][:, None] * ones
    slab[offs['b2'], :] = b2[0, 0]
    for q in range(group):                       # y = W1^T @ x (column convention)
        slab[offs['bd'] + q * H:offs['bd'] + (q + 1) * H, q * H:(q + 1) * H] = W1.T

    return jnp.asarray(slab), offs


# ---------------------------------------------------------------------------
# Kernel: one batch tile of TB samples (lane axis), all NP quadrature nodes.
# ---------------------------------------------------------------------------
def _make_kernel(H, NP, D, offs, group, tb):
    GH = group * H
    NPG = NP // group
    r_hu, r_hw = offs['hu'], offs['hw']
    r_w0t, r_w0c = offs['w0t'], offs['w0c']
    r_b0, r_b1 = offs['b0'], offs['b1']
    r_w2, r_b2, r_bd = offs['w2'], offs['b2'], offs['bd']

    def kernel(x_ref, p_ref, o_ref):
        t_row = x_ref[0:1, :]                                   # (1, TB) survival times

        # tau[j, b] = t_b * 0.5*(1+u_j)   (the 1/2 is folded into the slab rows)
        tau = t_row * p_ref[r_hu:r_hu + NP, :]                  # (NP, TB)

        # cwb[h, b] = b0[h] + sum_d W0[1+d, h] * cov[d, b]   (lane-dense rank-1 FMAs;
        # covariate rows are sublane selects, weights are pre-broadcast -> no XLU).
        cwb = p_ref[r_b0:r_b0 + H, :]                           # (H, TB)
        for d in range(D):
            w0c = p_ref[r_w0c + d * H:r_w0c + (d + 1) * H, :]   # (H, TB)
            cwb = cwb + x_ref[1 + d:2 + d, :] * w0c
        w0t = p_ref[r_w0t:r_w0t + H, :]                         # (H, TB)

        # Layer 0: h0[j, h, b] = relu(tau[j,b] * W0_t[h] + cwb[h,b])
        h0 = jnp.maximum(tau[:, None, :] * w0t[None, :, :] + cwb[None, :, :], 0.0)  # (NP,H,TB)

        # Layer 1: block-diagonal (GROUP copies of W1^T) -> K = GROUP*H = 128 MXU matmul.
        bd = p_ref[r_bd:r_bd + GH, 0:GH]                        # (GH, GH)
        h0g = h0.reshape(NPG, GH, tb)                           # metadata-only reshape
        h1 = jnp.stack(
            [jnp.dot(bd, h0g[g], preferred_element_type=jnp.float32) for g in range(NPG)],
            axis=0).reshape(NP, H, tb)
        h1 = jnp.maximum(h1 + p_ref[r_b1:r_b1 + H, :][None, :, :], 0.0)   # (NP, H, TB)

        # Layer 2 (H -> 1): lane-dense VPU multiply + sublane reduce over H.
        w2 = p_ref[r_w2:r_w2 + H, :]                            # (H, TB)
        g = jnp.sum(h1 * w2[None, :, :], axis=1) + p_ref[r_b2:r_b2 + 1, :]   # (NP, TB)

        # Stable softplus on a fully lane-dense (NP, TB) tile.
        f = jnp.maximum(g, 0.0) + jnp.log1p(jnp.exp(-jnp.abs(g)))

        # Gauss-Legendre quadrature: pred[b] = t_b * sum_j (0.5*w_j) * f[j, b]
        # (padded node rows carry weight 0).
        pred = t_row * jnp.sum(p_ref[r_hw:r_hw + NP, :] * f, axis=0, keepdims=True)  # (1, TB)
        o_ref[...] = jnp.tanh(pred)

    return kernel


def survival_decoder_forward(x, slab, offs, *, z_dim, hidden_dim, np_pad,
                             group=GROUP, tb=TB):
    """x: (B, 1 + z_dim) with x[:,0] = time t, x[:,1:] = latent covariates -> (B, 1)."""
    d_in = 1 + z_dim
    assert x.shape[1] == d_in
    B = x.shape[0]
    B_pad = _round_up(max(B, 1), tb)

    # Transpose to (features, batch) so the lane axis is the batch; pad with zeros
    # (t = 0 rows produce exactly 0 output and are sliced away below).
    xt = jnp.zeros((d_in, B_pad), jnp.float32).at[:, :B].set(x.astype(jnp.float32).T)

    rows = slab.shape[0]
    kernel = _make_kernel(hidden_dim, np_pad, z_dim, offs, group, tb)

    out = pl.pallas_call(
        kernel,
        grid=(B_pad // tb,),
        in_specs=[
            pl.BlockSpec((d_in, tb), lambda i: (0, i)),       # per-step activation tile
            pl.BlockSpec((rows, 128), lambda i: (0, 0)),      # resident parameter slab
        ],
        out_specs=pl.BlockSpec((1, tb), lambda i: (0, i)),    # lane-dense output row
        out_shape=jax.ShapeDtypeStruct((1, B_pad), jnp.float32),
        compiler_params=pltpu.CompilerParams(dimension_semantics=("parallel",)),
    )(xt, slab)

    return out[0, :B][:, None]                                # back to (B, 1)


# ---------------------------------------------------------------------------
# Parameter init (matches the PyTorch module's shapes / init scheme) + reference
# ---------------------------------------------------------------------------
def init_params(key, z_dim, hidden_dim, n):
    d_in = z_dim + 1
    k0, k1, k2, kb0, kb1, kb2 = jax.random.split(key, 6)

    # kaiming_normal_(fan_out, relu): std = sqrt(2 / out_features)
    W0_pt = jax.random.normal(k0, (hidden_dim, d_in), jnp.float32) * np.sqrt(2.0 / hidden_dim)
    W1_pt = jax.random.normal(k1, (hidden_dim, hidden_dim), jnp.float32) * np.sqrt(2.0 / hidden_dim)
    bound2 = 1.0 / np.sqrt(hidden_dim)
    W2_pt = jax.random.uniform(k2, (1, hidden_dim), jnp.float32, -bound2, bound2)

    b0 = jax.random.uniform(kb0, (1, hidden_dim), jnp.float32,
                            -1.0 / np.sqrt(d_in), 1.0 / np.sqrt(d_in))
    b1 = jax.random.uniform(kb1, (1, hidden_dim), jnp.float32,
                            -1.0 / np.sqrt(hidden_dim), 1.0 / np.sqrt(hidden_dim))
    b2 = jax.random.uniform(kb2, (1, 1), jnp.float32, -bound2, bound2)

    u_n, w_n = np.polynomial.legendre.leggauss(n)

    return {
        'W0': W0_pt.T, 'b0': b0,                               # (d_in, H), (1, H)
        'W1': W1_pt.T, 'b1': b1,                               # (H, H),    (1, H)
        'W2': W2_pt.T, 'b2': b2,                               # (H, 1),    (1, 1)
        'u_n': jnp.asarray(u_n, jnp.float32)[None, :],         # (1, n)
        'w_n': jnp.asarray(w_n, jnp.float32)[None, :],         # (1, n)
    }


def reference_forward(x, params):
    """Pure-JAX replica of the PyTorch forward (correctness check)."""
    n = params['u_n'].shape[1]
    t = x[:, 0:1]
    cov = x[:, 1:]
    tau = (t / 2.0) @ (1.0 + params['u_n'])                    # (B, n)
    tau_ = tau.reshape(-1, 1)                                  # (B*n, 1)
    repped = jnp.repeat(cov, n, axis=0)                        # (B*n, D)
    taux = jnp.concatenate([tau_, repped], axis=1)             # (B*n, 1+D)
    h = jnp.maximum(taux @ params['W0'] + params['b0'], 0.0)
    h = jnp.maximum(h @ params['W1'] + params['b1'], 0.0)
    f = jax.nn.softplus(h @ params['W2'] + params['b2'])       # (B*n, 1)
    f = f.reshape(t.shape[0], n, 1)
    pred = (t / 2.0) * jnp.sum(params['w_n'][:, :, None] * f, axis=1)
    return jnp.tanh(pred)


if __name__ == "__main__":
    B, Z_DIM, HIDDEN, N = 200, 4, 32, 15
    NP_PAD = _round_up(N, 8)                 # pad quadrature axis to a sublane multiple

    key = jax.random.PRNGKey(0)
    kx, kp = jax.random.split(key)
    params = init_params(kp, Z_DIM, HIDDEN, N)
    slab, offs = pack_params(params, NP_PAD)

    # x = [t | z]; keep t positive as a survival time.
    z = jax.random.normal(kx, (B, Z_DIM), jnp.float32)
    t = jnp.abs(jax.random.normal(jax.random.fold_in(kx, 1), (B, 1), jnp.float32)) + 0.1
    x = jnp.concatenate([t, z], axis=1)                        # (B, 1 + z_dim)

    forward = jax.jit(lambda xv: survival_decoder_forward(
        xv, slab, offs, z_dim=Z_DIM, hidden_dim=HIDDEN, np_pad=NP_PAD))

    out = jax.block_until_ready(forward(x))                    # (B, 1)

    ref = reference_forward(x, params)
    np.testing.assert_allclose(np.asarray(out), np.asarray(ref), rtol=1e-5, atol=1e-5)

    print("KERNEL_OK")
</pallas_src>

<mosaic_0001>
module attributes {stable_mosaic.version = 11 : i64} {
  func.func @kernel(%arg0: i32, %arg1: memref<5x128xf32, #tpu.memory_space<vmem>>, %arg2: memref<424x128xf32, #tpu.memory_space<vmem>>, %arg3: memref<1x128xf32, #tpu.memory_space<vmem>>) attributes {dimension_semantics = [#tpu.dimension_semantics<parallel>], iteration_bounds = array<i64: 2>, scalar_prefetch = 0 : i64, scratch_operands = 0 : i64, tpu.core_type = #tpu.core_type<tc>, window_params = [{transform_indices = @transform_0, window_bounds = array<i64: 5, 128>}, {pipeline_mode = #tpu.pipeline_mode<synchronous>, transform_indices = @transform_1, window_bounds = array<i64: 424, 128>}, {transform_indices = @transform_2, window_bounds = array<i64: 1, 128>}]} {
    %c0 = arith.constant 0 : index
    %c0_0 = arith.constant 0 : index
    %0 = vector.load %arg1[%c0, %c0_0] : memref<5x128xf32, #tpu.memory_space<vmem>>, vector<1x128xf32>
    %c0_1 = arith.constant 0 : index
    %c0_2 = arith.constant 0 : index
    %1 = vector.load %arg2[%c0_1, %c0_2] : memref<424x128xf32, #tpu.memory_space<vmem>>, vector<16x128xf32>
    %2 = vector.broadcast %0 : vector<1x128xf32> to vector<16x128xf32>
    %3 = arith.mulf %2, %1 : vector<16x128xf32>
    %c192 = arith.constant 192 : index
    %c0_3 = arith.constant 0 : index
    %4 = vector.load %arg2[%c192, %c0_3] : memref<424x128xf32, #tpu.memory_space<vmem>>, vector<32x128xf32>
    %c64 = arith.constant 64 : index
    %c0_4 = arith.constant 0 : index
    %5 = vector.load %arg2[%c64, %c0_4] : memref<424x128xf32, #tpu.memory_space<vmem>>, vector<32x128xf32>
    %c1 = arith.constant 1 : index
    %c0_5 = arith.constant 0 : index
    %6 = vector.load %arg1[%c1, %c0_5] : memref<5x128xf32, #tpu.memory_space<vmem>>, vector<1x128xf32>
    %7 = vector.broadcast %6 : vector<1x128xf32> to vector<32x128xf32>
    %8 = arith.mulf %7, %5 : vector<32x128xf32>
    %9 = arith.addf %4, %8 : vector<32x128xf32>
    %c96 = arith.constant 96 : index
    %c0_6 = arith.constant 0 : index
    %10 = vector.load %arg2[%c96, %c0_6] : memref<424x128xf32, #tpu.memory_space<vmem>>, vector<32x128xf32>
    %c2 = arith.constant 2 : index
    %c0_7 = arith.constant 0 : index
    %11 = vector.load %arg1[%c2, %c0_7] : memref<5x128xf32, #tpu.memory_space<vmem>>, vector<1x128xf32>
    %12 = vector.broadcast %11 : vector<1x128xf32> to vector<32x128xf32>
    %13 = arith.mulf %12, %10 : vector<32x128xf32>
    %14 = arith.addf %9, %13 : vector<32x128xf32>
    %c128 = arith.constant 128 : index
    %c0_8 = arith.constant 0 : index
    %15 = vector.load %arg2[%c128, %c0_8] : memref<424x128xf32, #tpu.memory_space<vmem>>, vector<32x128xf32>
    %c3 = arith.constant 3 : index
    %c0_9 = arith.constant 0 : index
    %16 = vector.load %arg1[%c3, %c0_9] : memref<5x128xf32, #tpu.memory_space<vmem>>, vector<1x128xf32>
    %17 = vector.broadcast %16 : vector<1x128xf32> to vector<32x128xf32>
    %18 = arith.mulf %17, %15 : vector<32x128xf32>
    %19 = arith.addf %14, %18 : vector<32x128xf32>
    %c160 = arith.constant 160 : index
    %c0_10 = arith.constant 0 : index
    %20 = vector.load %arg2[%c160, %c0_10] : memref<424x128xf32, #tpu.memory_space<vmem>>, vector<32x128xf32>
    %c4 = arith.constant 4 : index
    %c0_11 = arith.constant 0 : index
    %21 = vector.load %arg1[%c4, %c0_11] : memref<5x128xf32, #tpu.memory_space<vmem>>, vector<1x128xf32>
    %22 = vector.broadcast %21 : vector<1x128xf32> to vector<32x128xf32>
    %23 = arith.mulf %22, %20 : vector<32x128xf32>
    %24 = arith.addf %19, %23 : vector<32x128xf32>
    %c32 = arith.constant 32 : index
    %c0_12 = arith.constant 0 : index
    %25 = vector.load %arg2[%c32, %c0_12] : memref<424x128xf32, #tpu.memory_space<vmem>>, vector<32x128xf32>
    %26 = vector.shape_cast %3 : vector<16x128xf32> to vector<16x1x128xf32>
    %27 = vector.shape_cast %25 : vector<32x128xf32> to vector<1x32x128xf32>
    %28 = vector.broadcast %26 : vector<16x1x128xf32> to vector<16x32x128xf32>
    %29 = vector.broadcast %27 : vector<1x32x128xf32> to vector<16x32x128xf32>
    %30 = arith.mulf %28, %29 : vector<16x32x128xf32>
    %31 = vector.shape_cast %24 : vector<32x128xf32> to vector<1x32x128xf32>
    %32 = vector.broadcast %31 : vector<1x32x128xf32> to vector<16x32x128xf32>
    %33 = arith.addf %30, %32 : vector<16x32x128xf32>
    %cst = arith.constant 0.000000e+00 : f32
    %34 = vector.broadcast %cst : f32 to vector<16x32x128xf32>
    %35 = arith.maximumf %33, %34 : vector<16x32x128xf32>
    %c296 = arith.constant 296 : index
    %c0_13 = arith.constant 0 : index
    %36 = vector.load %arg2[%c296, %c0_13] : memref<424x128xf32, #tpu.memory_space<vmem>>, vector<128x128xf32>
    %37 = vector.shape_cast %35 : vector<16x32x128xf32> to vector<4x128x128xf32>
    %38 = vector.extract_strided_slice %37 {offsets = [0, 0, 0], sizes = [1, 128, 128], strides = [1, 1, 1]} : vector<4x128x128xf32> to vector<1x128x128xf32>
    %39 = vector.shape_cast %38 : vector<1x128x128xf32> to vector<128x128xf32>
    %cst_14 = arith.constant dense<0.000000e+00> : vector<128x128xf32>
    %40 = tpu.matmul %36, %39, %cst_14 {dimension_numbers = #tpu.dot_dimension_numbers<[1], [0], [0], [1], [0, 0, 1, 1], [], []>} : vector<128x128xf32>, vector<128x128xf32>, vector<128x128xf32> -> vector<128x128xf32>
    %41 = vector.extract_strided_slice %37 {offsets = [1, 0, 0], sizes = [1, 128, 128], strides = [1, 1, 1]} : vector<4x128x128xf32> to vector<1x128x128xf32>
    %42 = vector.shape_cast %41 : vector<1x128x128xf32> to vector<128x128xf32>
    %cst_15 = arith.constant dense<0.000000e+00> : vector<128x128xf32>
    %43 = tpu.matmul %36, %42, %cst_15 {dimension_numbers = #tpu.dot_dimension_numbers<[1], [0], [0], [1], [0, 0, 1, 1], [], []>} : vector<128x128xf32>, vector<128x128xf32>, vector<128x128xf32> -> vector<128x128xf32>
    %44 = vector.extract_strided_slice %37 {offsets = [2, 0, 0], sizes = [1, 128, 128], strides = [1, 1, 1]} : vector<4x128x128xf32> to vector<1x128x128xf32>
    %45 = vector.shape_cast %44 : vector<1x128x128xf32> to vector<128x128xf32>
    %cst_16 = arith.constant dense<0.000000e+00> : vector<128x128xf32>
    %46 = tpu.matmul %36, %45, %cst_16 {dimension_numbers = #tpu.dot_dimension_numbers<[1], [0], [0], [1], [0, 0, 1, 1], [], []>} : vector<128x128xf32>, vector<128x128xf32>, vector<128x128xf32> -> vector<128x128xf32>
    %47 = vector.extract_strided_slice %37 {offsets = [3, 0, 0], sizes = [1, 128, 128], strides = [1, 1, 1]} : vector<4x128x128xf32> to vector<1x128x128xf32>
    %48 = vector.shape_cast %47 : vector<1x128x128xf32> to vector<128x128xf32>
    %cst_17 = arith.constant dense<0.000000e+00> : vector<128x128xf32>
    %49 = tpu.matmul %36, %48, %cst_17 {dimension_numbers = #tpu.dot_dimension_numbers<[1], [0], [0], [1], [0, 0, 1, 1], [], []>} : vector<128x128xf32>, vector<128x128xf32>, vector<128x128xf32> -> vector<128x128xf32>
    %50 = vector.shape_cast %40 : vector<128x128xf32> to vector<1x128x128xf32>
    %51 = vector.shape_cast %43 : vector<128x128xf32> to vector<1x128x128xf32>
    %52 = vector.shape_cast %46 : vector<128x128xf32> to vector<1x128x128xf32>
    %53 = vector.shape_cast %49 : vector<128x128xf32> to vector<1x128x128xf32>
    %54 = tpu.concatenate %50, %51, %52, %53 in 0 : vector<1x128x128xf32>, vector<1x128x128xf32>, vector<1x128x128xf32>, vector<1x128x128xf32> -> vector<4x128x128xf32>
    %55 = vector.shape_cast %54 : vector<4x128x128xf32> to vector<16x32x128xf32>
    %c224 = arith.constant 224 : index
    %c0_18 = arith.constant 0 : index
    %56 = vector.load %arg2[%c224, %c0_18] : memref<424x128xf32, #tpu.memory_space<vmem>>, vector<32x128xf32>
    %57 = vector.shape_cast %56 : vector<32x128xf32> to vector<1x32x128xf32>
    %58 = vector.broadcast %57 : vector<1x32x128xf32> to vector<16x32x128xf32>
    %59 = arith.addf %55, %58 : vector<16x32x128xf32>
    %cst_19 = arith.constant 0.000000e+00 : f32
    %60 = vector.broadcast %cst_19 : f32 to vector<16x32x128xf32>
    %61 = arith.maximumf %59, %60 : vector<16x32x128xf32>
    %c256 = arith.constant 256 : index
    %c0_20 = arith.constant 0 : index
    %62 = vector.load %arg2[%c256, %c0_20] : memref<424x128xf32, #tpu.memory_space<vmem>>, vector<32x128xf32>
    %63 = vector.shape_cast %62 : vector<32x128xf32> to vector<1x32x128xf32>
    %64 = vector.broadcast %63 : vector<1x32x128xf32> to vector<16x32x128xf32>
    %65 = arith.mulf %61, %64 : vector<16x32x128xf32>
    %cst_21 = arith.constant dense<0.000000e+00> : vector<16x128xf32>
    %66 = vector.multi_reduction <add>, %65, %cst_21 [1] : vector<16x32x128xf32> to vector<16x128xf32>
    %c288 = arith.constant 288 : index
    %c0_22 = arith.constant 0 : index
    %67 = vector.load %arg2[%c288, %c0_22] : memref<424x128xf32, #tpu.memory_space<vmem>>, vector<1x128xf32>
    %68 = vector.broadcast %67 : vector<1x128xf32> to vector<16x128xf32>
    %69 = arith.addf %66, %68 : vector<16x128xf32>
    %cst_23 = arith.constant 0.000000e+00 : f32
    %70 = vector.broadcast %cst_23 : f32 to vector<16x128xf32>
    %71 = arith.maximumf %69, %70 : vector<16x128xf32>
    %72 = math.absf %69 : vector<16x128xf32>
    %cst_24 = arith.constant 0.000000e+00 : f32
    %73 = vector.broadcast %cst_24 : f32 to vector<16x128xf32>
    %74 = arith.subf %73, %72 : vector<16x128xf32>
    %75 = math.exp %74 : vector<16x128xf32>
    %76 = math.log1p %75 : vector<16x128xf32>
    %77 = arith.addf %71, %76 : vector<16x128xf32>
    %c16 = arith.constant 16 : index
    %c0_25 = arith.constant 0 : index
    %78 = vector.load %arg2[%c16, %c0_25] : memref<424x128xf32, #tpu.memory_space<vmem>>, vector<16x128xf32>
    %79 = arith.mulf %78, %77 : vector<16x128xf32>
    %cst_26 = arith.constant dense<0.000000e+00> : vector<128xf32>
    %80 = vector.multi_reduction <add>, %79, %cst_26 [0] : vector<16x128xf32> to vector<128xf32>
    %81 = vector.shape_cast %80 : vector<128xf32> to vector<1x128xf32>
    %82 = arith.mulf %0, %81 : vector<1x128xf32>
    %83 = math.tanh %82 : vector<1x128xf32>
    %c0_27 = arith.constant 0 : index
    %c0_28 = arith.constant 0 : index
    %84 = vector.load %arg3[%c0_27, %c0_28] : memref<1x128xf32, #tpu.memory_space<vmem>>, vector<1x128xf32>
    tpu.vector_store %arg3[%c0_27, %c0_28], %83 {strides = array<i32>} : memref<1x128xf32, #tpu.memory_space<vmem>>, vector<1x128xf32>,
    return
  }
  func.func @transform_0(%arg0: i32) -> (i32, i32) {
    %c0_i32 = arith.constant 0 : i32
    %c0_i32_0 = arith.constant 0 : i32
    return %c0_i32, %arg0 : i32, i32
  }
  func.func @transform_1(%arg0: i32) -> (i32, i32) {
    %c0_i32 = arith.constant 0 : i32
    %c0_i32_0 = arith.constant 0 : i32
    %c0_i32_1 = arith.constant 0 : i32
    return %c0_i32, %c0_i32_0 : i32, i32
  }
  func.func @transform_2(%arg0: i32) -> (i32, i32) {
    %c0_i32 = arith.constant 0 : i32
    %c0_i32_0 = arith.constant 0 : i32
    return %c0_i32, %arg0 : i32, i32
  }
}

</mosaic_0001>

<llo_original>
// kernel: _lambda_.1
$region0: #{_lambda_.1}
  #allocation0 [shape = 'u32[]', space=smem, size = 0x4, offset = 0x4, fixed_abs, tag = 'smem constant byte address 0x4 - core index']
  #allocation1 [shape = 'u32[144,128]{1,0:T(1,128)}', space=vmem, size = 0x12000, scoped, tag = 'internal scratch']
  %s0 = inlined_call_operand.vmem [shape: f32[5,256], index: 0, kind: input, shape index: {}]
  %s1 = inlined_call_operand.hbm [shape: f32[424,128], index: 1, kind: input, shape index: {}]
  %s2 = inlined_call_operand.vmem [shape: f32[1,256], index: 2, kind: output, shape index: {}]
  %s3 = sld [smem:[#allocation0]]
  $region45: #{_lambda_.1} parent=0
    _
  %s5 = ssub.s32 1, %s3
  %s6 = scalar_select 0, %s5, %s3
  $region1: #{_lambda_.1} parent=0
    #allocation2 [shape = 'u8[217088]{0}', space=vmem, size = 0x35000, scoped, tag = 'input window, operand 1, single buffered']
    #allocation3 [shape = 's32[2]{0}', space=sflag, size = 0x8, scoped, tag = 'scoped memory for _lambda_.1']
    %7 = vsyncpa [#allocation3], 0
    loop: start=0, step=1, limit=4
    $region2: #{_lambda_.1} parent=1 // loop_pre_header
      _
    $region3: #{_lambda_.1} parent=1 // loop_header
      %s9 = sphi 0, %s13
      %p10 = scmp.ge.s32.totalorder %s9, 4
      %s19 = sphi 0, %s21
      %s22 = sphi 0, %s19
      %s23 = sphi 0, %s22
      %s39 = sphi 0, %s23
      %s43 = sphi 0, %s43
      %s45 = sphi 0, %s43
      %s46 = sphi 0, %s45
      %s60 = sphi 0, %s46
      %s66 = sphi 0, %s68
      %s69 = sphi 0, %s66
      %s70 = sphi 0, %s69
      %s86 = sphi 0, %s70
    $region4: #{_lambda_.1} parent=1 // loop_header_branch
      %12 = sbr.rel (%p10) target = $region8
    $region5: #{_lambda_.1} parent=1 // loop_body
      %s14 = ssub.s32 %s9, 1
      %s15 = ssub.s32 %s9, 2
      %s16 = sadd.s32 %s9, 1
      %s17 = ssub.s32 %s9, %s16
      %p18 = scmp.eq.s32.totalorder %s17, 0
      %s20 = sadd.s32 %s19, 1
      %s21 = scalar_select %p18, %s19, %s20
      %p24 = pneg %p18
      %p25 = scmp.eq.s32.totalorder %s9, 1
      %p26 = por %p24, %p25
      %p27 = scmp.ne.s32.totalorder %s19, %s22
      %p28 = scmp.eq.s32.totalorder %s9, 0
      %p29 = por %p27, %p28
      %p30 = scmp.ne.s32.totalorder %s19, %s22
      %p31 = scmp.eq.s32.totalorder %s14, 1
      %p32 = por %p30, %p31
      %p33 = scmp.ne.s32.totalorder %s22, %s23
      %p34 = scmp.eq.s32.totalorder %s14, 0
      %p35 = por %p33, %p34
      %p36 = scmp.ne.s32.totalorder %s22, %s23
      %p37 = scmp.eq.s32.totalorder %s15, 1
      %p38 = por %p36, %p37
      %p40 = scmp.ne.s32.totalorder %s23, %s39
      %p41 = scmp.eq.s32.totalorder %s15, 0
      %p42 = por %p40, %p41
      %s44 = sadd.s32 %s43, 1
      %p47 = scmp.eq.s32.totalorder %s9, 1
      %p48 = scmp.ne.s32.totalorder %s43, %s45
      %p49 = scmp.eq.s32.totalorder %s9, 0
      %p50 = por %p48, %p49
      %p51 = scmp.ne.s32.totalorder %s43, %s45
      %p52 = scmp.eq.s32.totalorder %s14, 1
      %p53 = por %p51, %p52
      %p54 = scmp.ne.s32.totalorder %s45, %s46
      %p55 = scmp.eq.s32.totalorder %s14, 0
      %p56 = por %p54, %p55
      %p57 = scmp.ne.s32.totalorder %s45, %s46
      %p58 = scmp.eq.s32.totalorder %s15, 1
      %p59 = por %p57, %p58
      %p61 = scmp.ne.s32.totalorder %s46, %s60
      %p62 = scmp.eq.s32.totalorder %s15, 0
      %p63 = por %p61, %p62
      %s64 = ssub.s32 %s9, %s16
      %p65 = scmp.eq.s32.totalorder %s64, 0
      %s67 = sadd.s32 %s66, 1
      %s68 = scalar_select %p65, %s66, %s67
      %p71 = pneg %p65
      %p72 = scmp.eq.s32.totalorder %s9, 1
      %p73 = por %p71, %p72
      %p74 = scmp.ne.s32.totalorder %s66, %s69
      %p75 = scmp.eq.s32.totalorder %s9, 0
      %p76 = por %p74, %p75
      %p77 = scmp.ne.s32.totalorder %s66, %s69
      %p78 = scmp.eq.s32.totalorder %s14, 1
      %p79 = por %p77, %p78
      %p80 = scmp.ne.s32.totalorder %s69, %s70
      %p81 = scmp.eq.s32.totalorder %s14, 0
      %p82 = por %p80, %p81
      %p83 = scmp.ne.s32.totalorder %s69, %s70
      %p84 = scmp.eq.s32.totalorder %s15, 1
      %p85 = por %p83, %p84
      %p87 = scmp.ne.s32.totalorder %s70, %s86
      %p88 = scmp.eq.s32.totalorder %s15, 0
      %p89 = por %p87, %p88
      %p90 = scmp.le.s32.totalorder 1, %s9
      %p91 = scmp.lt.s32.totalorder %s9, 3
      %p92 = pnand %p90, %p91
      %p93 = pneg %p92
      // Predicated region
      $region9: #{_lambda_.1} parent=5 // pred_check
        _
      $region10: #{_lambda_.1} parent=5 // pred_check_branch
        %95 = sbr.rel (%p92) target = $region12
      $region11: #{_lambda_.1} parent=5 // pred_region
        %s96 = ssub.s32 %s9, 1
        // Predicated region
        $region13: #{_lambda_.1} parent=11 // pred_check
          %p97 = pneg %p56
        $region14: #{_lambda_.1} parent=11 // pred_check_branch
          %99 = sbr.rel (%p97) target = $region16
        $region15: #{_lambda_.1} parent=11 // pred_region
          %s101 = ssub.s32 6784, 6784
          %102 = vsyncadd [#allocation3], %s101
          %s103 = sshll.u32 [#allocation2], 4
          %s104 = int_to_ptr.vmem [resolvable:$true] %s103
          %109 = dma.hbm_to_vmem [thread:$0]  %s1, 6784, %s104, [#allocation3], 128, 128, 8
        $region16: #{_lambda_.1} parent=11 // pred_fallthru
          _
      $region12: #{_lambda_.1} parent=5 // pred_fallthru
        _
      %p110 = scmp.lt.s32.totalorder %s9, 2
      // Predicated region
      $region17: #{_lambda_.1} parent=5 // pred_check
        %p111 = pneg %p110
      $region18: #{_lambda_.1} parent=5 // pred_check_branch
        %113 = sbr.rel (%p111) target = $region20
      $region19: #{_lambda_.1} parent=5 // pred_region
        // Predicated region
        $region21: #{_lambda_.1} parent=19 // pred_check
          %p114 = pneg %p29
        $region22: #{_lambda_.1} parent=19 // pred_check_branch
          %116 = sbr.rel (%p114) target = $region24
        $region23: #{_lambda_.1} parent=19 // pred_region
          %p117 = scmp.lt.s32.totalorder %s9, 1
          %s118 = scalar_select %p117, %s9, 1
          %s119 = smul.addr %s118, 8
          %s120 = scalar_lea.vmem %s0, %s119
        $region24: #{_lambda_.1} parent=19 // pred_fallthru
          _
      $region20: #{_lambda_.1} parent=5 // pred_fallthru
        _
      %p121 = scmp.le.s32.totalorder 1, %s9
      %p122 = scmp.lt.s32.totalorder %s9, 3
      %p123 = pnand %p121, %p122
      %p124 = pneg %p123
      // Predicated region
      $region25: #{_lambda_.1} parent=5 // pred_check
        _
      $region26: #{_lambda_.1} parent=5 // pred_check_branch
        %126 = sbr.rel (%p123) target = $region28
      $region27: #{_lambda_.1} parent=5 // pred_region
        %s127 = ssub.s32 %s9, 1
        // Predicated region
        $region29: #{_lambda_.1} parent=27 // pred_check
          %p128 = pneg %p56
        $region30: #{_lambda_.1} parent=27 // pred_check_branch
          %130 = sbr.rel (%p128) target = $region32
        $region31: #{_lambda_.1} parent=27 // pred_region
          %131 = dma.done [#allocation3], 6784
        $region32: #{_lambda_.1} parent=27 // pred_fallthru
          _
        %p132 = scmp.lt.s32.totalorder %s14, 1
        %s133 = scalar_select %p132, %s14, 1
        %s134 = smul.addr %s133, 8
        %s135 = scalar_lea.vmem %s0, %s134
        %p136 = pneg %p35
        %p137 = pneg %p32
        %p138 = pneg %p56
        %p139 = pneg %p53
        %p140 = pneg %p82
        %p141 = pneg %p79
        %p142 = scmp.lt.s32.totalorder %s14, 1
        %s143 = scalar_select %p142, %s14, 1
        %s144 = scalar_lea.vmem %s2, %s143
        %p145 = scmp.lt.s32.totalorder %s14, 1
        %s146 = scalar_select %p145, %s14, 1
        %s147 = smul.addr %s146, 8
        %s148 = scalar_lea.vmem %s0, %s147
        %p149 = scmp.lt.s32.totalorder %s14, 1
        %s150 = scalar_select %p149, %s14, 1
        %s151 = scalar_lea.vmem %s2, %s150
        %v152 = vld [vmem:[%s148] sm:$0x1]
        %v153 = vld [vmem:[#allocation2] sm:$0xff]
        %v154 = vld [vmem:[#allocation2 + $0x8] sm:$0xff]
        %v155 = vlaneseq
        %v156 = vshrl.u32 %v155, 7
        %v157 = vsub.s32 0, %v156
        %v158 = vrot.slane %v152, %v157
        %v159 = vmul.f32 %v158, %v153
        %v160 = vmul.f32 %v158, %v154
        %v161 = vld [vmem:[#allocation2 + $0xc0] sm:$0xff]
        %v162 = vld [vmem:[#allocation2 + $0xc8] sm:$0xff]
        %v163 = vld [vmem:[#allocation2 + $0xd0] sm:$0xff]
        %v164 = vld [vmem:[#allocation2 + $0xd8] sm:$0xff]
        %v165 = vld [vmem:[#allocation2 + $0x40] sm:$0xff]
        %v166 = vld [vmem:[#allocation2 + $0x48] sm:$0xff]
        %v167 = vld [vmem:[#allocation2 + $0x50] sm:$0xff]
        %v168 = vld [vmem:[#allocation2 + $0x58] sm:$0xff]
        %v169 = vld [vmem:[%s148 + $0x1] sm:$0x1]
        %v170 = vlaneseq
        %v171 = vshrl.u32 %v170, 7
        %v172 = vsub.s32 0, %v171
        %v173 = vrot.slane %v169, %v172
        %v174 = vmul.f32 %v173, %v165
        %v175 = vmul.f32 %v173, %v166
        %v176 = vmul.f32 %v173, %v167
        %v177 = vmul.f32 %v173, %v168
        %v178 = vadd.f32 %v161, %v174
        %v179 = vadd.f32 %v162, %v175
        %v180 = vadd.f32 %v163, %v176
        %v181 = vadd.f32 %v164, %v177
        %v182 = vld [vmem:[#allocation2 + $0x60] sm:$0xff]
        %v183 = vld [vmem:[#allocation2 + $0x68] sm:$0xff]
        %v184 = vld [vmem:[#allocation2 + $0x70] sm:$0xff]
        %v185 = vld [vmem:[#allocation2 + $0x78] sm:$0xff]
        %v186 = vld [vmem:[%s148 + $0x2] sm:$0x1]
        %v187 = vlaneseq
        %v188 = vshrl.u32 %v187, 7
        %v189 = vsub.s32 0, %v188
        %v190 = vrot.slane %v186, %v189
        %v191 = vmul.f32 %v190, %v182
        %v192 = vmul.f32 %v190, %v183
        %v193 = vmul.f32 %v190, %v184
        %v194 = vmul.f32 %v190, %v185
        %v195 = vadd.f32 %v178, %v191
        %v196 = vadd.f32 %v179, %v192
        %v197 = vadd.f32 %v180, %v193
        %v198 = vadd.f32 %v181, %v194
        %v199 = vld [vmem:[#allocation2 + $0x80] sm:$0xff]
        %v200 = vld [vmem:[#allocation2 + $0x88] sm:$0xff]
        %v201 = vld [vmem:[#allocation2 + $0x90] sm:$0xff]
        %v202 = vld [vmem:[#allocation2 + $0x98] sm:$0xff]
        %v203 = vld [vmem:[%s148 + $0x3] sm:$0x1]
        %v204 = vlaneseq
        %v205 = vshrl.u32 %v204, 7
        %v206 = vsub.s32 0, %v205
        %v207 = vrot.slane %v203, %v206
        %v208 = vmul.f32 %v207, %v199
        %v209 = vmul.f32 %v207, %v200
        %v210 = vmul.f32 %v207, %v201
        %v211 = vmul.f32 %v207, %v202
        %v212 = vadd.f32 %v195, %v208
        %v213 = vadd.f32 %v196, %v209
        %v214 = vadd.f32 %v197, %v210
        %v215 = vadd.f32 %v198, %v211
        %v216 = vld [vmem:[#allocation2 + $0xa0] sm:$0xff]
        %v217 = vld [vmem:[#allocation2 + $0xa8] sm:$0xff]
        %v218 = vld [vmem:[#allocation2 + $0xb0] sm:$0xff]
        %v219 = vld [vmem:[#allocation2 + $0xb8] sm:$0xff]
        %v220 = vld [vmem:[%s148 + $0x4] sm:$0x1]
        %v221 = vlaneseq
        %v222 = vshrl.u32 %v221, 7
        %v223 = vsub.s32 0, %v222
        %v224 = vrot.slane %v220, %v223
        %v225 = vmul.f32 %v224, %v216
        %v226 = vmul.f32 %v224, %v217
        %v227 = vmul.f32 %v224, %v218
        %v228 = vmul.f32 %v224, %v219
        %v229 = vadd.f32 %v212, %v225
        %v230 = vadd.f32 %v213, %v226
        %v231 = vadd.f32 %v214, %v227
        %v232 = vadd.f32 %v215, %v228
        %v233 = vld [vmem:[#allocation2 + $0x20] sm:$0xff]
        %v234 = vld [vmem:[#allocation2 + $0x28] sm:$0xff]
        %v235 = vld [vmem:[#allocation2 + $0x30] sm:$0xff]
        %v236 = vld [vmem:[#allocation2 + $0x38] sm:$0xff]
        %v239 = vcombine.high %v159, %v159
        %v241 = vunpack.c.l.s4 1966171168
        %v242 = vunpack.c.0.s8 %v241
        %v243 = vlaneseq
        %v244 = vshrl.u32 %v243, 7
        %v245 = vsub.s32 %v242, %v244
        %v246 = vrot.slane %v159, %v245
        %v248 = vunpack.c.l.s4 1966171168
        %v249 = vunpack.c.0.s8 %v248
        %v250 = vlaneseq
        %v251 = vshrl.u32 %v250, 7
        %v252 = vsub.s32 %v249, %v251
        %v253 = vrot.slane %v239, %v252
        %v254 = vcombine.high %v246, %v246
        %v255 = vcombine.high %v253, %v253
        %v257 = vunpack.c.l.s4 1966171168
        %v258 = vunpack.c.0.s8 %v257
        %v259 = vlaneseq
        %v260 = vshrl.u32 %v259, 7
        %v261 = vsub.s32 %v258, %v260
        %v262 = vrot.slane %v246, %v261
        %v264 = vunpack.c.l.s4 1966171168
        %v265 = vunpack.c.0.s8 %v264
        %v266 = vlaneseq
        %v267 = vshrl.u32 %v266, 7
        %v268 = vsub.s32 %v265, %v267
        %v269 = vrot.slane %v253, %v268
        %v271 = vunpack.c.l.s4 1966171168
        %v272 = vunpack.c.0.s8 %v271
        %v273 = vlaneseq
        %v274 = vshrl.u32 %v273, 7
        %v275 = vsub.s32 %v272, %v274
        %v276 = vrot.slane %v254, %v275
        %v278 = vunpack.c.l.s4 1966171168
        %v279 = vunpack.c.0.s8 %v278
        %v280 = vlaneseq
        %v281 = vshrl.u32 %v280, 7
        %v282 = vsub.s32 %v279, %v281
        %v283 = vrot.slane %v255, %v282
        %v284 = vcombine.high %v262, %v262
        %v285 = vcombine.high %v269, %v269
        %v286 = vcombine.high %v276, %v276
        %v287 = vcombine.high %v283, %v283
        %v288 = vcombine.high %v160, %v160
        %v290 = vunpack.c.l.s4 1966171168
        %v291 = vunpack.c.0.s8 %v290
        %v292 = vlaneseq
        %v293 = vshrl.u32 %v292, 7
        %v294 = vsub.s32 %v291, %v293
        %v295 = vrot.slane %v160, %v294
        %v297 = vunpack.c.l.s4 1966171168
        %v298 = vunpack.c.0.s8 %v297
        %v299 = vlaneseq
        %v300 = vshrl.u32 %v299, 7
        %v301 = vsub.s32 %v298, %v300
        %v302 = vrot.slane %v288, %v301
        %v303 = vcombine.high %v295, %v295
        %v304 = vcombine.high %v302, %v302
        %v306 = vunpack.c.l.s4 1966171168
        %v307 = vunpack.c.0.s8 %v306
        %v308 = vlaneseq
        %v309 = vshrl.u32 %v308, 7
        %v310 = vsub.s32 %v307, %v309
        %v311 = vrot.slane %v295, %v310
        %v313 = vunpack.c.l.s4 1966171168
        %v314 = vunpack.c.0.s8 %v313
        %v315 = vlaneseq
        %v316 = vshrl.u32 %v315, 7
        %v317 = vsub.s32 %v314, %v316
        %v318 = vrot.slane %v302, %v317
        %v320 = vunpack.c.l.s4 1966171168
        %v321 = vunpack.c.0.s8 %v320
        %v322 = vlaneseq
        %v323 = vshrl.u32 %v322, 7
        %v324 = vsub.s32 %v321, %v323
        %v325 = vrot.slane %v303, %v324
        %v327 = vunpack.c.l.s4 1966171168
        %v328 = vunpack.c.0.s8 %v327
        %v329 = vlaneseq
        %v330 = vshrl.u32 %v329, 7
        %v331 = vsub.s32 %v328, %v330
        %v332 = vrot.slane %v304, %v331
        %v333 = vcombine.high %v311, %v311
        %v334 = vcombine.high %v318, %v318
        %v335 = vcombine.high %v325, %v325
        %v336 = vcombine.high %v332, %v332
        %v337 = vlaneseq
        %v338 = vshrl.u32 %v337, 7
        %v339 = vsub.s32 0, %v338
        %v340 = vrot.slane %v262, %v339
        %v341 = vlaneseq
        %v342 = vshrl.u32 %v341, 7
        %v343 = vsub.s32 0, %v342
        %v344 = vrot.slane %v276, %v343
        %v345 = vlaneseq
        %v346 = vshrl.u32 %v345, 7
        %v347 = vsub.s32 0, %v346
        %v348 = vrot.slane %v284, %v347
        %v349 = vlaneseq
        %v350 = vshrl.u32 %v349, 7
        %v351 = vsub.s32 0, %v350
        %v352 = vrot.slane %v286, %v351
        %v353 = vlaneseq
        %v354 = vshrl.u32 %v353, 7
        %v355 = vsub.s32 0, %v354
        %v356 = vrot.slane %v269, %v355
        %v357 = vlaneseq
        %v358 = vshrl.u32 %v357, 7
        %v359 = vsub.s32 0, %v358
        %v360 = vrot.slane %v283, %v359
        %v361 = vlaneseq
        %v362 = vshrl.u32 %v361, 7
        %v363 = vsub.s32 0, %v362
        %v364 = vrot.slane %v285, %v363
        %v365 = vlaneseq
        %v366 = vshrl.u32 %v365, 7
        %v367 = vsub.s32 0, %v366
        %v368 = vrot.slane %v287, %v367
        %v369 = vlaneseq
        %v370 = vshrl.u32 %v369, 7
        %v371 = vsub.s32 0, %v370
        %v372 = vrot.slane %v311, %v371
        %v373 = vlaneseq
        %v374 = vshrl.u32 %v373, 7
        %v375 = vsub.s32 0, %v374
        %v376 = vrot.slane %v325, %v375
        %v377 = vlaneseq
        %v378 = vshrl.u32 %v377, 7
        %v379 = vsub.s32 0, %v378
        %v380 = vrot.slane %v333, %v379
        %v381 = vlaneseq
        %v382 = vshrl.u32 %v381, 7
        %v383 = vsub.s32 0, %v382
        %v384 = vrot.slane %v335, %v383
        %v385 = vlaneseq
        %v386 = vshrl.u32 %v385, 7
        %v387 = vsub.s32 0, %v386
        %v388 = vrot.slane %v318, %v387
        %v389 = vlaneseq
        %v390 = vshrl.u32 %v389, 7
        %v391 = vsub.s32 0, %v390
        %v392 = vrot.slane %v332, %v391
        %v393 = vlaneseq
        %v394 = vshrl.u32 %v393, 7
        %v395 = vsub.s32 0, %v394
        %v396 = vrot.slane %v334, %v395
        %v397 = vlaneseq
        %v398 = vshrl.u32 %v397, 7
        %v399 = vsub.s32 0, %v398
        %v400 = vrot.slane %v336, %v399
        %v417 = vmul.f32 %v340, %v233
        %v418 = vmul.f32 %v340, %v234
        %v419 = vmul.f32 %v340, %v235
        %v420 = vmul.f32 %v340, %v236
        %v421 = vmul.f32 %v344, %v233
        %v422 = vmul.f32 %v344, %v234
        %v423 = vmul.f32 %v344, %v235
        %v424 = vmul.f32 %v344, %v236
        %v425 = vmul.f32 %v348, %v233
        %v426 = vmul.f32 %v348, %v234
        %v427 = vmul.f32 %v348, %v235
        %v428 = vmul.f32 %v348, %v236
        %v429 = vmul.f32 %v352, %v233
        %v430 = vmul.f32 %v352, %v234
        %v431 = vmul.f32 %v352, %v235
        %v432 = vmul.f32 %v352, %v236
        %v433 = vmul.f32 %v356, %v233
        %v434 = vmul.f32 %v356, %v234
        %v435 = vmul.f32 %v356, %v235
        %v436 = vmul.f32 %v356, %v236
        %v437 = vmul.f32 %v360, %v233
        %v438 = vmul.f32 %v360, %v234
        %v439 = vmul.f32 %v360, %v235
        %v440 = vmul.f32 %v360, %v236
        %v441 = vmul.f32 %v364, %v233
        %v442 = vmul.f32 %v364, %v234
        %v443 = vmul.f32 %v364, %v235
        %v444 = vmul.f32 %v364, %v236
        %v445 = vmul.f32 %v368, %v233
        %v446 = vmul.f32 %v368, %v234
        %v447 = vmul.f32 %v368, %v235
        %v448 = vmul.f32 %v368, %v236
        %v449 = vmul.f32 %v372, %v233
        %v450 = vmul.f32 %v372, %v234
        %v451 = vmul.f32 %v372, %v235
        %v452 = vmul.f32 %v372, %v236
        %v453 = vmul.f32 %v376, %v233
        %v454 = vmul.f32 %v376, %v234
        %v455 = vmul.f32 %v376, %v235
        %v456 = vmul.f32 %v376, %v236
        %v457 = vmul.f32 %v380, %v233
        %v458 = vmul.f32 %v380, %v234
        %v459 = vmul.f32 %v380, %v235
        %v460 = vmul.f32 %v380, %v236
        %v461 = vmul.f32 %v384, %v233
        %v462 = vmul.f32 %v384, %v234
        %v463 = vmul.f32 %v384, %v235
        %v464 = vmul.f32 %v384, %v236
        %v465 = vmul.f32 %v388, %v233
        %v466 = vmul.f32 %v388, %v234
        %v467 = vmul.f32 %v388, %v235
        %v468 = vmul.f32 %v388, %v236
        %v469 = vmul.f32 %v392, %v233
        %v470 = vmul.f32 %v392, %v234
        %v471 = vmul.f32 %v392, %v235
        %v472 = vmul.f32 %v392, %v236
        %v473 = vmul.f32 %v396, %v233
        %v474 = vmul.f32 %v396, %v234
        %v475 = vmul.f32 %v396, %v235
        %v476 = vmul.f32 %v396, %v236
        %v477 = vmul.f32 %v400, %v233
        %v478 = vmul.f32 %v400, %v234
        %v479 = vmul.f32 %v400, %v235
        %v480 = vmul.f32 %v400, %v236
        %v481 = vadd.f32 %v417, %v229
        %v482 = vadd.f32 %v418, %v230
        %v483 = vadd.f32 %v419, %v231
        %v484 = vadd.f32 %v420, %v232
        %v485 = vadd.f32 %v421, %v229
        %v486 = vadd.f32 %v422, %v230
        %v487 = vadd.f32 %v423, %v231
        %v488 = vadd.f32 %v424, %v232
        %v489 = vadd.f32 %v425, %v229
        %v490 = vadd.f32 %v426, %v230
        %v491 = vadd.f32 %v427, %v231
        %v492 = vadd.f32 %v428, %v232
        %v493 = vadd.f32 %v429, %v229
        %v494 = vadd.f32 %v430, %v230
        %v495 = vadd.f32 %v431, %v231
        %v496 = vadd.f32 %v432, %v232
        %v497 = vadd.f32 %v433, %v229
        %v498 = vadd.f32 %v434, %v230
        %v499 = vadd.f32 %v435, %v231
        %v500 = vadd.f32 %v436, %v232
        %v501 = vadd.f32 %v437, %v229
        %v502 = vadd.f32 %v438, %v230
        %v503 = vadd.f32 %v439, %v231
        %v504 = vadd.f32 %v440, %v232
        %v505 = vadd.f32 %v441, %v229
        %v506 = vadd.f32 %v442, %v230
        %v507 = vadd.f32 %v443, %v231
        %v508 = vadd.f32 %v444, %v232
        %v509 = vadd.f32 %v445, %v229
        %v510 = vadd.f32 %v446, %v230
        %v511 = vadd.f32 %v447, %v231
        %v512 = vadd.f32 %v448, %v232
        %v513 = vadd.f32 %v449, %v229
        %v514 = vadd.f32 %v450, %v230
        %v515 = vadd.f32 %v451, %v231
        %v516 = vadd.f32 %v452, %v232
        %v517 = vadd.f32 %v453, %v229
        %v518 = vadd.f32 %v454, %v230
        %v519 = vadd.f32 %v455, %v231
        %v520 = vadd.f32 %v456, %v232
        %v521 = vadd.f32 %v457, %v229
        %v522 = vadd.f32 %v458, %v230
        %v523 = vadd.f32 %v459, %v231
        %v524 = vadd.f32 %v460, %v232
        %v525 = vadd.f32 %v461, %v229
        %v526 = vadd.f32 %v462, %v230
        %v527 = vadd.f32 %v463, %v231
        %v528 = vadd.f32 %v464, %v232
        %v529 = vadd.f32 %v465, %v229
        %v530 = vadd.f32 %v466, %v230
        %v531 = vadd.f32 %v467, %v231
        %v532 = vadd.f32 %v468, %v232
        %v533 = vadd.f32 %v469, %v229
        %v534 = vadd.f32 %v470, %v230
        %v535 = vadd.f32 %v471, %v231
        %v536 = vadd.f32 %v472, %v232
        %v537 = vadd.f32 %v473, %v229
        %v538 = vadd.f32 %v474, %v230
        %v539 = vadd.f32 %v475, %v231
        %v540 = vadd.f32 %v476, %v232
        %v541 = vadd.f32 %v477, %v229
        %v542 = vadd.f32 %v478, %v230
        %v543 = vadd.f32 %v479, %v231
        %v544 = vadd.f32 %v480, %v232
        %v545 = vmax.f32 %v481, 0.0
        %v546 = vmax.f32 %v482, 0.0
        %v547 = vmax.f32 %v483, 0.0
        %v548 = vmax.f32 %v484, 0.0
        %v549 = vmax.f32 %v485, 0.0
        %v550 = vmax.f32 %v486, 0.0
        %v551 = vmax.f32 %v487, 0.0
        %v552 = vmax.f32 %v488, 0.0
        %v553 = vmax.f32 %v489, 0.0
        %v554 = vmax.f32 %v490, 0.0
        %v555 = vmax.f32 %v491, 0.0
        %v556 = vmax.f32 %v492, 0.0
        %v557 = vmax.f32 %v493, 0.0
        %v558 = vmax.f32 %v494, 0.0
        %v559 = vmax.f32 %v495, 0.0
        %v560 = vmax.f32 %v496, 0.0
        %v561 = vmax.f32 %v497, 0.0
        %v562 = vmax.f32 %v498, 0.0
        %v563 = vmax.f32 %v499, 0.0
        %v564 = vmax.f32 %v500, 0.0
        %v565 = vmax.f32 %v501, 0.0
        %v566 = vmax.f32 %v502, 0.0
        %v567 = vmax.f32 %v503, 0.0
        %v568 = vmax.f32 %v504, 0.0
        %v569 = vmax.f32 %v505, 0.0
        %v570 = vmax.f32 %v506, 0.0
        %v571 = vmax.f32 %v507, 0.0
        %v572 = vmax.f32 %v508, 0.0
        %v573 = vmax.f32 %v509, 0.0
        %v574 = vmax.f32 %v510, 0.0
        %v575 = vmax.f32 %v511, 0.0
        %v576 = vmax.f32 %v512, 0.0
        %v577 = vmax.f32 %v513, 0.0
        %v578 = vmax.f32 %v514, 0.0
        %v579 = vmax.f32 %v515, 0.0
        %v580 = vmax.f32 %v516, 0.0
        %v581 = vmax.f32 %v517, 0.0
        %v582 = vmax.f32 %v518, 0.0
        %v583 = vmax.f32 %v519, 0.0
        %v584 = vmax.f32 %v520, 0.0
        %v585 = vmax.f32 %v521, 0.0
        %v586 = vmax.f32 %v522, 0.0
        %v587 = vmax.f32 %v523, 0.0
        %v588 = vmax.f32 %v524, 0.0
        %v589 = vmax.f32 %v525, 0.0
        %v590 = vmax.f32 %v526, 0.0
        %v591 = vmax.f32 %v527, 0.0
        %v592 = vmax.f32 %v528, 0.0
        %v593 = vmax.f32 %v529, 0.0
        %v594 = vmax.f32 %v530, 0.0
        %v595 = vmax.f32 %v531, 0.0
        %v596 = vmax.f32 %v532, 0.0
        %v597 = vmax.f32 %v533, 0.0
        %v598 = vmax.f32 %v534, 0.0
        %v599 = vmax.f32 %v535, 0.0
        %v600 = vmax.f32 %v536, 0.0
        %v601 = vmax.f32 %v537, 0.0
        %v602 = vmax.f32 %v538, 0.0
        %v603 = vmax.f32 %v539, 0.0
        %v604 = vmax.f32 %v540, 0.0
        %v605 = vmax.f32 %v541, 0.0
        %v606 = vmax.f32 %v542, 0.0
        %v607 = vmax.f32 %v543, 0.0
        %v608 = vmax.f32 %v544, 0.0
        %v609 = vld [vmem:[#allocation2 + $0x128] sm:$0xff]
        %v610 = vld [vmem:[#allocation2 + $0x130] sm:$0xff]
        %v611 = vld [vmem:[#allocation2 + $0x138] sm:$0xff]
        %v612 = vld [vmem:[#allocation2 + $0x140] sm:$0xff]
        %v613 = vld [vmem:[#allocation2 + $0x148] sm:$0xff]
        %v614 = vld [vmem:[#allocation2 + $0x150] sm:$0xff]
        %v615 = vld [vmem:[#allocation2 + $0x158] sm:$0xff]
        %v616 = vld [vmem:[#allocation2 + $0x160] sm:$0xff]
        %v617 = vld [vmem:[#allocation2 + $0x168] sm:$0xff]
        %v618 = vld [vmem:[#allocation2 + $0x170] sm:$0xff]
        %v619 = vld [vmem:[#allocation2 + $0x178] sm:$0xff]
        %v620 = vld [vmem:[#allocation2 + $0x180] sm:$0xff]
        %v621 = vld [vmem:[#allocation2 + $0x188] sm:$0xff]
        %v622 = vld [vmem:[#allocation2 + $0x190] sm:$0xff]
        %v623 = vld [vmem:[#allocation2 + $0x198] sm:$0xff]
        %v624 = vld [vmem:[#allocation2 + $0x1a0] sm:$0xff]
        %625 = vmatprep.subr.mxu0 0.0
        %626 = vmatpush1.msra.mxu0 %v545
        %627 = vmatprep.subr.mxu0 0.0
        %628 = vmatpush1.msra.mxu0 %v546
        %629 = vmatprep.subr.mxu0 0.0
        %630 = vmatpush1.msra.mxu0 %v547
        %631 = vmatprep.subr.mxu0 0.0
        %632 = vmatpush1.msra.mxu0 %v548
        %633 = vmatprep.subr.mxu0 0.0
        %634 = vmatpush1.msra.mxu0 %v549
        %635 = vmatprep.subr.mxu0 0.0
        %636 = vmatpush1.msra.mxu0 %v550
        %637 = vmatprep.subr.mxu0 0.0
        %638 = vmatpush1.msra.mxu0 %v551
        %639 = vmatprep.subr.mxu0 0.0
        %640 = vmatpush1.msra.mxu0 %v552
        %641 = vmatprep.subr.mxu0 0.0
        %642 = vmatpush1.msra.mxu0 %v553
        %643 = vmatprep.subr.mxu0 0.0
        %644 = vmatpush1.msra.mxu0 %v554
        %645 = vmatprep.subr.mxu0 0.0
        %646 = vmatpush1.msra.mxu0 %v555
        %647 = vmatprep.subr.mxu0 0.0
        %648 = vmatpush1.msra.mxu0 %v556
        %649 = vmatprep.subr.mxu0 0.0
        %650 = vmatpush1.msra.mxu0 %v557
        %651 = vmatprep.subr.mxu0 0.0
        %652 = vmatpush1.msra.mxu0 %v558
        %653 = vmatprep.subr.mxu0 0.0
        %654 = vmatpush1.msra.mxu0 %v559
        %655 = vmatprep.subr.mxu0 0.0
        %656 = vmatpush1.msra.mxu0 %v560
        %657 = vmatprep.subr.mxu0 0.0
        %658 = vmatpush1.msra.mxu0 0.0
        %659 = vmatprep.subr.mxu0 0.0
        %660 = vmatpush1.msra.mxu0 0.0
        %661 = vmatprep.subr.mxu0 0.0
        %662 = vmatpush1.msra.mxu0 0.0
        %663 = vmatprep.subr.mxu0 0.0
        %664 = vmatpush1.msra.mxu0 0.0
        %665 = vmatprep.subr.mxu0 0.0
        %666 = vmatpush1.msra.mxu0 0.0
        %667 = vmatprep.subr.mxu0 0.0
        %668 = vmatpush1.msra.mxu0 0.0
        %669 = vmatprep.subr.mxu0 0.0
        %670 = vmatpush1.msra.mxu0 0.0
        %671 = vmatprep.subr.mxu0 0.0
        %672 = vmatpush1.msra.mxu0 0.0
        %673 = vmatprep.subr.mxu0 0.0
        %674 = vmatpush1.msra.mxu0 0.0
        %675 = vmatprep.subr.mxu0 0.0
        %676 = vmatpush1.msra.mxu0 0.0
        %677 = vmatprep.subr.mxu0 0.0
        %678 = vmatpush1.msra.mxu0 0.0
        %679 = vmatprep.subr.mxu0 0.0
        %680 = vmatpush1.msra.mxu0 0.0
        %681 = vmatprep.subr.mxu0 0.0
        %682 = vmatpush1.msra.mxu0 0.0
        %683 = vmatprep.subr.mxu0 0.0
        %684 = vmatpush1.msra.mxu0 0.0
        %685 = vmatprep.subr.mxu0 0.0
        %686 = vmatpush1.msra.mxu0 0.0
        %687 = vmatprep.subr.mxu0 0.0
        %688 = vmatpush1.msra.mxu0 0.0
        %689 = vmatprep.mubr.f32.mxu0 0.0
        %690 = vmatmul.mubr.f32.gmra.mrb[0].mxu0 %v609
        %v691 = vpop.f32.mrb[0].mxu0
        %v692 = vadd.f32 0.0, %v691
        %v693 = vpop.f32.mrb[0].mxu0
        %694 = vmatprep.mubr.f32.mxu0 0.0
        %695 = vmatmul.mubr.f32.gmra.mrb[0].mxu0 %v610
        %v696 = vpop.f32.mrb[0].mxu0
        %v697 = vadd.f32 0.0, %v696
        %v698 = vpop.f32.mrb[0].mxu0
        %699 = vmatprep.mubr.f32.mxu0 0.0
        %700 = vmatmul.mubr.f32.gmra.mrb[0].mxu0 %v611
        %v701 = vpop.f32.mrb[0].mxu0
        %v702 = vadd.f32 0.0, %v701
        %v703 = vpop.f32.mrb[0].mxu0
        %704 = vmatprep.mubr.f32.mxu0 0.0
        %705 = vmatmul.mubr.f32.gmra.mrb[0].mxu0 %v612
        %v706 = vpop.f32.mrb[0].mxu0
        %v707 = vadd.f32 0.0, %v706
        %v708 = vpop.f32.mrb[0].mxu0
        %709 = vmatprep.mubr.f32.mxu0 0.0
        %710 = vmatmul.mubr.f32.gmra.mrb[0].mxu0 %v613
        %v711 = vpop.f32.mrb[0].mxu0
        %v712 = vadd.f32 0.0, %v711
        %v713 = vpop.f32.mrb[0].mxu0
        %714 = vmatprep.mubr.f32.mxu0 0.0
        %715 = vmatmul.mubr.f32.gmra.mrb[0].mxu0 %v614
        %v716 = vpop.f32.mrb[0].mxu0
        %v717 = vadd.f32 0.0, %v716
        %v718 = vpop.f32.mrb[0].mxu0
        %719 = vmatprep.mubr.f32.mxu0 0.0
        %720 = vmatmul.mubr.f32.gmra.mrb[0].mxu0 %v615
        %v721 = vpop.f32.mrb[0].mxu0
        %v722 = vadd.f32 0.0, %v721
        %v723 = vpop.f32.mrb[0].mxu0
        %724 = vmatprep.mubr.f32.mxu0 0.0
        %725 = vmatmul.mubr.f32.gmra.mrb[0].mxu0 %v616
        %v726 = vpop.f32.mrb[0].mxu0
        %v727 = vadd.f32 0.0, %v726
        %v728 = vpop.f32.mrb[0].mxu0
        %729 = vmatprep.mubr.f32.mxu0 0.0
        %730 = vmatmul.mubr.f32.gmra.mrb[0].mxu0 %v617
        %v731 = vpop.f32.mrb[0].mxu0
        %v732 = vadd.f32 0.0, %v731
        %v733 = vpop.f32.mrb[0].mxu0
        %734 = vmatprep.mubr.f32.mxu0 0.0
        %735 = vmatmul.mubr.f32.gmra.mrb[0].mxu0 %v618
        %v736 = vpop.f32.mrb[0].mxu0
        %v737 = vadd.f32 0.0, %v736
        %v738 = vpop.f32.mrb[0].mxu0
        %739 = vmatprep.mubr.f32.mxu0 0.0
        %740 = vmatmul.mubr.f32.gmra.mrb[0].mxu0 %v619
        %v741 = vpop.f32.mrb[0].mxu0
        %v742 = vadd.f32 0.0, %v741
        %v743 = vpop.f32.mrb[0].mxu0
        %744 = vmatprep.mubr.f32.mxu0 0.0
        %745 = vmatmul.mubr.f32.gmra.mrb[0].mxu0 %v620
        %v746 = vpop.f32.mrb[0].mxu0
        %v747 = vadd.f32 0.0, %v746
        %v748 = vpop.f32.mrb[0].mxu0
        %749 = vmatprep.mubr.f32.mxu0 0.0
        %750 = vmatmul.mubr.f32.gmra.mrb[0].mxu0 %v621
        %v751 = vpop.f32.mrb[0].mxu0
        %v752 = vadd.f32 0.0, %v751
        %v753 = vpop.f32.mrb[0].mxu0
        %754 = vmatprep.mubr.f32.mxu0 0.0
        %755 = vmatmul.mubr.f32.gmra.mrb[0].mxu0 %v622
        %v756 = vpop.f32.mrb[0].mxu0
        %v757 = vadd.f32 0.0, %v756
        %v758 = vpop.f32.mrb[0].mxu0
        %759 = vmatprep.mubr.f32.mxu0 0.0
        %760 = vmatmul.mubr.f32.gmra.mrb[0].mxu0 %v623
        %v761 = vpop.f32.mrb[0].mxu0
        %v762 = vadd.f32 0.0, %v761
        %v763 = vpop.f32.mrb[0].mxu0
        %764 = vmatprep.mubr.f32.mxu0 0.0
        %765 = vmatmul.mubr.f32.gmra.mrb[0].mxu0 %v624
        %v766 = vpop.f32.mrb[0].mxu0
        %v767 = vadd.f32 0.0, %v766
        %v768 = vpop.f32.mrb[0].mxu0
        %769 = vdwg.mxu0
        %770 = vmatprep.subr.mxu0 0.0
        %771 = vmatpush1.msra.mxu0 %v561
        %772 = vmatprep.subr.mxu0 0.0
        %773 = vmatpush1.msra.mxu0 %v562
        %774 = vmatprep.subr.mxu0 0.0
        %775 = vmatpush1.msra.mxu0 %v563
        %776 = vmatprep.subr.mxu0 0.0
        %777 = vmatpush1.msra.mxu0 %v564
        %778 = vmatprep.subr.mxu0 0.0
        %779 = vmatpush1.msra.mxu0 %v565
        %780 = vmatprep.subr.mxu0 0.0
        %781 = vmatpush1.msra.mxu0 %v566
        %782 = vmatprep.subr.mxu0 0.0
        %783 = vmatpush1.msra.mxu0 %v567
        %784 = vmatprep.subr.mxu0 0.0
        %785 = vmatpush1.msra.mxu0 %v568
        %786 = vmatprep.subr.mxu0 0.0
        %787 = vmatpush1.msra.mxu0 %v569
        %788 = vmatprep.subr.mxu0 0.0
        %789 = vmatpush1.msra.mxu0 %v570
        %790 = vmatprep.subr.mxu0 0.0
        %791 = vmatpush1.msra.mxu0 %v571
        %792 = vmatprep.subr.mxu0 0.0
        %793 = vmatpush1.msra.mxu0 %v572
        %794 = vmatprep.subr.mxu0 0.0
        %795 = vmatpush1.msra.mxu0 %v573
        %796 = vmatprep.subr.mxu0 0.0
        %797 = vmatpush1.msra.mxu0 %v574
        %798 = vmatprep.subr.mxu0 0.0
        %799 = vmatpush1.msra.mxu0 %v575
        %800 = vmatprep.subr.mxu0 0.0
        %801 = vmatpush1.msra.mxu0 %v576
        %802 = vmatprep.subr.mxu0 0.0
        %803 = vmatpush1.msra.mxu0 0.0
        %804 = vmatprep.subr.mxu0 0.0
        %805 = vmatpush1.msra.mxu0 0.0
        %806 = vmatprep.subr.mxu0 0.0
        %807 = vmatpush1.msra.mxu0 0.0
        %808 = vmatprep.subr.mxu0 0.0
        %809 = vmatpush1.msra.mxu0 0.0
        %810 = vmatprep.subr.mxu0 0.0
        %811 = vmatpush1.msra.mxu0 0.0
        %812 = vmatprep.subr.mxu0 0.0
        %813 = vmatpush1.msra.mxu0 0.0
        %814 = vmatprep.subr.mxu0 0.0
        %815 = vmatpush1.msra.mxu0 0.0
        %816 = vmatprep.subr.mxu0 0.0
        %817 = vmatpush1.msra.mxu0 0.0
        %818 = vmatprep.subr.mxu0 0.0
        %819 = vmatpush1.msra.mxu0 0.0
        %820 = vmatprep.subr.mxu0 0.0
        %821 = vmatpush1.msra.mxu0 0.0
        %822 = vmatprep.subr.mxu0 0.0
        %823 = vmatpush1.msra.mxu0 0.0
        %824 = vmatprep.subr.mxu0 0.0
        %825 = vmatpush1.msra.mxu0 0.0
        %826 = vmatprep.subr.mxu0 0.0
        %827 = vmatpush1.msra.mxu0 0.0
        %828 = vmatprep.subr.mxu0 0.0
        %829 = vmatpush1.msra.mxu0 0.0
        %830 = vmatprep.subr.mxu0 0.0
        %831 = vmatpush1.msra.mxu0 0.0
        %832 = vmatprep.subr.mxu0 0.0
        %833 = vmatpush1.msra.mxu0 0.0
        %834 = vmatprep.mubr.f32.mxu0 0.0
        %835 = vmatmul.mubr.f32.gmra.mrb[0].mxu0 %v609
        %v836 = vpop.f32.mrb[0].mxu0
        %v837 = vadd.f32 0.0, %v836
        %v838 = vpop.f32.mrb[0].mxu0
        %839 = vmatprep.mubr.f32.mxu0 0.0
        %840 = vmatmul.mubr.f32.gmra.mrb[0].mxu0 %v610
        %v841 = vpop.f32.mrb[0].mxu0
        %v842 = vadd.f32 0.0, %v841
        %v843 = vpop.f32.mrb[0].mxu0
        %844 = vmatprep.mubr.f32.mxu0 0.0
        %845 = vmatmul.mubr.f32.gmra.mrb[0].mxu0 %v611
        %v846 = vpop.f32.mrb[0].mxu0
        %v847 = vadd.f32 0.0, %v846
        %v848 = vpop.f32.mrb[0].mxu0
        %849 = vmatprep.mubr.f32.mxu0 0.0
        %850 = vmatmul.mubr.f32.gmra.mrb[0].mxu0 %v612
        %v851 = vpop.f32.mrb[0].mxu0
        %v852 = vadd.f32 0.0, %v851
        %v853 = vpop.f32.mrb[0].mxu0
        %854 = vmatprep.mubr.f32.mxu0 0.0
        %855 = vmatmul.mubr.f32.gmra.mrb[0].mxu0 %v613
        %v856 = vpop.f32.mrb[0].mxu0
        %v857 = vadd.f32 0.0, %v856
        %v858 = vpop.f32.mrb[0].mxu0
        %859 = vmatprep.mubr.f32.mxu0 0.0
        %860 = vmatmul.mubr.f32.gmra.mrb[0].mxu0 %v614
        %v861 = vpop.f32.mrb[0].mxu0
        %v862 = vadd.f32 0.0, %v861
        %v863 = vpop.f32.mrb[0].mxu0
        %864 = vmatprep.mubr.f32.mxu0 0.0
        %865 = vmatmul.mubr.f32.gmra.mrb[0].mxu0 %v615
        %v866 = vpop.f32.mrb[0].mxu0
        %v867 = vadd.f32 0.0, %v866
        %v868 = vpop.f32.mrb[0].mxu0
        %869 = vmatprep.mubr.f32.mxu0 0.0
        %870 = vmatmul.mubr.f32.gmra.mrb[0].mxu0 %v616
        %v871 = vpop.f32.mrb[0].mxu0
        %v872 = vadd.f32 0.0, %v871
        %v873 = vpop.f32.mrb[0].mxu0
        %874 = vmatprep.mubr.f32.mxu0 0.0
        %875 = vmatmul.mubr.f32.gmra.mrb[0].mxu0 %v617
        %v876 = vpop.f32.mrb[0].mxu0
        %v877 = vadd.f32 0.0, %v876
        %v878 = vpop.f32.mrb[0].mxu0
        %879 = vmatprep.mubr.f32.mxu0 0.0
        %880 = vmatmul.mubr.f32.gmra.mrb[0].mxu0 %v618
        %v881 = vpop.f32.mrb[0].mxu0
        %v882 = vadd.f32 0.0, %v881
        %v883 = vpop.f32.mrb[0].mxu0
        %884 = vmatprep.mubr.f32.mxu0 0.0
        %885 = vmatmul.mubr.f32.gmra.mrb[0].mxu0 %v619
        %v886 = vpop.f32.mrb[0].mxu0
        %v887 = vadd.f32 0.0, %v886
        %v888 = vpop.f32.mrb[0].mxu0
        %889 = vmatprep.mubr.f32.mxu0 0.0
        %890 = vmatmul.mubr.f32.gmra.mrb[0].mxu0 %v620
        %v891 = vpop.f32.mrb[0].mxu0
        %v892 = vadd.f32 0.0, %v891
        %v893 = vpop.f32.mrb[0].mxu0
        %894 = vmatprep.mubr.f32.mxu0 0.0
        %895 = vmatmul.mubr.f32.gmra.mrb[0].mxu0 %v621
        %v896 = vpop.f32.mrb[0].mxu0
        %v897 = vadd.f32 0.0, %v896
        %v898 = vpop.f32.mrb[0].mxu0
        %899 = vmatprep.mubr.f32.mxu0 0.0
        %900 = vmatmul.mubr.f32.gmra.mrb[0].mxu0 %v622
        %v901 = vpop.f32.mrb[0].mxu0
        %v902 = vadd.f32 0.0, %v901
        %v903 = vpop.f32.mrb[0].mxu0
        %904 = vmatprep.mubr.f32.mxu0 0.0
        %905 = vmatmul.mubr.f32.gmra.mrb[0].mxu0 %v623
        %v906 = vpop.f32.mrb[0].mxu0
        %v907 = vadd.f32 0.0, %v906
        %v908 = vpop.f32.mrb[0].mxu0
        %909 = vmatprep.mubr.f32.mxu0 0.0
        %910 = vmatmul.mubr.f32.gmra.mrb[0].mxu0 %v624
        %v911 = vpop.f32.mrb[0].mxu0
        %v912 = vadd.f32 0.0, %v911
        %v913 = vpop.f32.mrb[0].mxu0
        %914 = vdwg.mxu0
        %915 = vmatprep.subr.mxu0 0.0
        %916 = vmatpush1.msra.mxu0 %v577
        %917 = vmatprep.subr.mxu0 0.0
        %918 = vmatpush1.msra.mxu0 %v578
        %919 = vmatprep.subr.mxu0 0.0
        %920 = vmatpush1.msra.mxu0 %v579
        %921 = vmatprep.subr.mxu0 0.0
        %922 = vmatpush1.msra.mxu0 %v580
        %923 = vmatprep.subr.mxu0 0.0
        %924 = vmatpush1.msra.mxu0 %v581
        %925 = vmatprep.subr.mxu0 0.0
        %926 = vmatpush1.msra.mxu0 %v582
        %927 = vmatprep.subr.mxu0 0.0
        %928 = vmatpush1.msra.mxu0 %v583
        %929 = vmatprep.subr.mxu0 0.0
        %930 = vmatpush1.msra.mxu0 %v584
        %931 = vmatprep.subr.mxu0 0.0
        %932 = vmatpush1.msra.mxu0 %v585
        %933 = vmatprep.subr.mxu0 0.0
        %934 = vmatpush1.msra.mxu0 %v586
        %935 = vmatprep.subr.mxu0 0.0
        %936 = vmatpush1.msra.mxu0 %v587
        %937 = vmatprep.subr.mxu0 0.0
        %938 = vmatpush1.msra.mxu0 %v588
        %939 = vmatprep.subr.mxu0 0.0
        %940 = vmatpush1.msra.mxu0 %v589
        %941 = vmatprep.subr.mxu0 0.0
        %942 = vmatpush1.msra.mxu0 %v590
        %943 = vmatprep.subr.mxu0 0.0
        %944 = vmatpush1.msra.mxu0 %v591
        %945 = vmatprep.subr.mxu0 0.0
        %946 = vmatpush1.msra.mxu0 %v592
        %947 = vmatprep.subr.mxu0 0.0
        %948 = vmatpush1.msra.mxu0 0.0
        %949 = vmatprep.subr.mxu0 0.0
        %950 = vmatpush1.msra.mxu0 0.0
        %951 = vmatprep.subr.mxu0 0.0
        %952 = vmatpush1.msra.mxu0 0.0
        %953 = vmatprep.subr.mxu0 0.0
        %954 = vmatpush1.msra.mxu0 0.0
        %955 = vmatprep.subr.mxu0 0.0
        %956 = vmatpush1.msra.mxu0 0.0
        %957 = vmatprep.subr.mxu0 0.0
        %958 = vmatpush1.msra.mxu0 0.0
        %959 = vmatprep.subr.mxu0 0.0
        %960 = vmatpush1.msra.mxu0 0.0
        %961 = vmatprep.subr.mxu0 0.0
        %962 = vmatpush1.msra.mxu0 0.0
        %963 = vmatprep.subr.mxu0 0.0
        %964 = vmatpush1.msra.mxu0 0.0
        %965 = vmatprep.subr.mxu0 0.0
        %966 = vmatpush1.msra.mxu0 0.0
        %967 = vmatprep.subr.mxu0 0.0
        %968 = vmatpush1.msra.mxu0 0.0
        %969 = vmatprep.subr.mxu0 0.0
        %970 = vmatpush1.msra.mxu0 0.0
        %971 = vmatprep.subr.mxu0 0.0
        %972 = vmatpush1.msra.mxu0 0.0
        %973 = vmatprep.subr.mxu0 0.0
        %974 = vmatpush1.msra.mxu0 0.0
        %975 = vmatprep.subr.mxu0 0.0
        %976 = vmatpush1.msra.mxu0 0.0
        %977 = vmatprep.subr.mxu0 0.0
        %978 = vmatpush1.msra.mxu0 0.0
        %979 = vmatprep.mubr.f32.mxu0 0.0
        %980 = vmatmul.mubr.f32.gmra.mrb[0].mxu0 %v609
        %v981 = vpop.f32.mrb[0].mxu0
        %v982 = vadd.f32 0.0, %v981
        %v983 = vpop.f32.mrb[0].mxu0
        %984 = vmatprep.mubr.f32.mxu0 0.0
        %985 = vmatmul.mubr.f32.gmra.mrb[0].mxu0 %v610
        %v986 = vpop.f32.mrb[0].mxu0
        %v987 = vadd.f32 0.0, %v986
        %v988 = vpop.f32.mrb[0].mxu0
        %989 = vmatprep.mubr.f32.mxu0 0.0
        %990 = vmatmul.mubr.f32.gmra.mrb[0].mxu0 %v611
        %v991 = vpop.f32.mrb[0].mxu0
        %v992 = vadd.f32 0.0, %v991
        %v993 = vpop.f32.mrb[0].mxu0
        %994 = vmatprep.mubr.f32.mxu0 0.0
        %995 = vmatmul.mubr.f32.gmra.mrb[0].mxu0 %v612
        %v996 = vpop.f32.mrb[0].mxu0
        %v997 = vadd.f32 0.0, %v996
        %v998 = vpop.f32.mrb[0].mxu0
        %999 = vmatprep.mubr.f32.mxu0 0.0
        %1000 = vmatmul.mubr.f32.gmra.mrb[0].mxu0 %v613
        %v1001 = vpop.f32.mrb[0].mxu0
        %v1002 = vadd.f32 0.0, %v1001
        %v1003 = vpop.f32.mrb[0].mxu0
        %1004 = vmatprep.mubr.f32.mxu0 0.0
        %1005 = vmatmul.mubr.f32.gmra.mrb[0].mxu0 %v614
        %v1006 = vpop.f32.mrb[0].mxu0
        %v1007 = vadd.f32 0.0, %v1006
        %v1008 = vpop.f32.mrb[0].mxu0
        %1009 = vmatprep.mubr.f32.mxu0 0.0
        %1010 = vmatmul.mubr.f32.gmra.mrb[0].mxu0 %v615
        %v1011 = vpop.f32.mrb[0].mxu0
        %v1012 = vadd.f32 0.0, %v1011
        %v1013 = vpop.f32.mrb[0].mxu0
        %1014 = vmatprep.mubr.f32.mxu0 0.0
        %1015 = vmatmul.mubr.f32.gmra.mrb[0].mxu0 %v616
        %v1016 = vpop.f32.mrb[0].mxu0
        %v1017 = vadd.f32 0.0, %v1016
        %v1018 = vpop.f32.mrb[0].mxu0
        %1019 = vmatprep.mubr.f32.mxu0 0.0
        %1020 = vmatmul.mubr.f32.gmra.mrb[0].mxu0 %v617
        %v1021 = vpop.f32.mrb[0].mxu0
        %v1022 = vadd.f32 0.0, %v1021
        %v1023 = vpop.f32.mrb[0].mxu0
        %1024 = vmatprep.mubr.f32.mxu0 0.0
        %1025 = vmatmul.mubr.f32.gmra.mrb[0].mxu0 %v618
        %v1026 = vpop.f32.mrb[0].mxu0
        %v1027 = vadd.f32 0.0, %v1026
        %v1028 = vpop.f32.mrb[0].mxu0
        %1029 = vmatprep.mubr.f32.mxu0 0.0
        %1030 = vmatmul.mubr.f32.gmra.mrb[0].mxu0 %v619
        %v1031 = vpop.f32.mrb[0].mxu0
        %v1032 = vadd.f32 0.0, %v1031
        %v1033 = vpop.f32.mrb[0].mxu0
        %1034 = vmatprep.mubr.f32.mxu0 0.0
        %1035 = vmatmul.mubr.f32.gmra.mrb[0].mxu0 %v620
        %v1036 = vpop.f32.mrb[0].mxu0
        %v1037 = vadd.f32 0.0, %v1036
        %v1038 = vpop.f32.mrb[0].mxu0
        %1039 = vmatprep.mubr.f32.mxu0 0.0
        %1040 = vmatmul.mubr.f32.gmra.mrb[0].mxu0 %v621
        %v1041 = vpop.f32.mrb[0].mxu0
        %v1042 = vadd.f32 0.0, %v1041
        %v1043 = vpop.f32.mrb[0].mxu0
        %1044 = vmatprep.mubr.f32.mxu0 0.0
        %1045 = vmatmul.mubr.f32.gmra.mrb[0].mxu0 %v622
        %v1046 = vpop.f32.mrb[0].mxu0
        %v1047 = vadd.f32 0.0, %v1046
        %v1048 = vpop.f32.mrb[0].mxu0
        %1049 = vmatprep.mubr.f32.mxu0 0.0
        %1050 = vmatmul.mubr.f32.gmra.mrb[0].mxu0 %v623
        %v1051 = vpop.f32.mrb[0].mxu0
        %v1052 = vadd.f32 0.0, %v1051
        %v1053 = vpop.f32.mrb[0].mxu0
        %1054 = vmatprep.mubr.f32.mxu0 0.0
        %1055 = vmatmul.mubr.f32.gmra.mrb[0].mxu0 %v624
        %v1056 = vpop.f32.mrb[0].mxu0
        %v1057 = vadd.f32 0.0, %v1056
        %v1058 = vpop.f32.mrb[0].mxu0
        %1059 = vdwg.mxu0
        %1060 = vmatprep.subr.mxu0 0.0
        %1061 = vmatpush1.msra.mxu0 %v593
        %1062 = vmatprep.subr.mxu0 0.0
        %1063 = vmatpush1.msra.mxu0 %v594
        %1064 = vmatprep.subr.mxu0 0.0
        %1065 = vmatpush1.msra.mxu0 %v595
        %1066 = vmatprep.subr.mxu0 0.0
        %1067 = vmatpush1.msra.mxu0 %v596
        %1068 = vmatprep.subr.mxu0 0.0
        %1069 = vmatpush1.msra.mxu0 %v597
        %1070 = vmatprep.subr.mxu0 0.0
        %1071 = vmatpush1.msra.mxu0 %v598
        %1072 = vmatprep.subr.mxu0 0.0
        %1073 = vmatpush1.msra.mxu0 %v599
        %1074 = vmatprep.subr.mxu0 0.0
        %1075 = vmatpush1.msra.mxu0 %v600
        %1076 = vmatprep.subr.mxu0 0.0
        %1077 = vmatpush1.msra.mxu0 %v601
        %1078 = vmatprep.subr.mxu0 0.0
        %1079 = vmatpush1.msra.mxu0 %v602
        %1080 = vmatprep.subr.mxu0 0.0
        %1081 = vmatpush1.msra.mxu0 %v603
        %1082 = vmatprep.subr.mxu0 0.0
        %1083 = vmatpush1.msra.mxu0 %v604
        %1084 = vmatprep.subr.mxu0 0.0
        %1085 = vmatpush1.msra.mxu0 %v605
        %1086 = vmatprep.subr.mxu0 0.0
        %1087 = vmatpush1.msra.mxu0 %v606
        %1088 = vmatprep.subr.mxu0 0.0
        %1089 = vmatpush1.msra.mxu0 %v607
        %1090 = vmatprep.subr.mxu0 0.0
        %1091 = vmatpush1.msra.mxu0 %v608
        %1092 = vmatprep.subr.mxu0 0.0
        %1093 = vmatpush1.msra.mxu0 0.0
        %1094 = vmatprep.subr.mxu0 0.0
        %1095 = vmatpush1.msra.mxu0 0.0
        %1096 = vmatprep.subr.mxu0 0.0
        %1097 = vmatpush1.msra.mxu0 0.0
        %1098 = vmatprep.subr.mxu0 0.0
        %1099 = vmatpush1.msra.mxu0 0.0
        %1100 = vmatprep.subr.mxu0 0.0
        %1101 = vmatpush1.msra.mxu0 0.0
        %1102 = vmatprep.subr.mxu0 0.0
        %1103 = vmatpush1.msra.mxu0 0.0
        %1104 = vmatprep.subr.mxu0 0.0
        %1105 = vmatpush1.msra.mxu0 0.0
        %1106 = vmatprep.subr.mxu0 0.0
        %1107 = vmatpush1.msra.mxu0 0.0
        %1108 = vmatprep.subr.mxu0 0.0
        %1109 = vmatpush1.msra.mxu0 0.0
        %1110 = vmatprep.subr.mxu0 0.0
        %1111 = vmatpush1.msra.mxu0 0.0
        %1112 = vmatprep.subr.mxu0 0.0
        %1113 = vmatpush1.msra.mxu0 0.0
        %1114 = vmatprep.subr.mxu0 0.0
        %1115 = vmatpush1.msra.mxu0 0.0
        %1116 = vmatprep.subr.mxu0 0.0
        %1117 = vmatpush1.msra.mxu0 0.0
        %1118 = vmatprep.subr.mxu0 0.0
        %1119 = vmatpush1.msra.mxu0 0.0
        %1120 = vmatprep.subr.mxu0 0.0
        %1121 = vmatpush1.msra.mxu0 0.0
        %1122 = vmatprep.subr.mxu0 0.0
        %1123 = vmatpush1.msra.mxu0 0.0
        %1124 = vmatprep.mubr.f32.mxu0 0.0
        %1125 = vmatmul.mubr.f32.gmra.mrb[0].mxu0 %v609
        %v1126 = vpop.f32.mrb[0].mxu0
        %v1127 = vadd.f32 0.0, %v1126
        %v1128 = vpop.f32.mrb[0].mxu0
        %1129 = vmatprep.mubr.f32.mxu0 0.0
        %1130 = vmatmul.mubr.f32.gmra.mrb[0].mxu0 %v610
        %v1131 = vpop.f32.mrb[0].mxu0
        %v1132 = vadd.f32 0.0, %v1131
        %v1133 = vpop.f32.mrb[0].mxu0
        %1134 = vmatprep.mubr.f32.mxu0 0.0
        %1135 = vmatmul.mubr.f32.gmra.mrb[0].mxu0 %v611
        %v1136 = vpop.f32.mrb[0].mxu0
        %v1137 = vadd.f32 0.0, %v1136
        %v1138 = vpop.f32.mrb[0].mxu0
        %1139 = vmatprep.mubr.f32.mxu0 0.0
        %1140 = vmatmul.mubr.f32.gmra.mrb[0].mxu0 %v612
        %v1141 = vpop.f32.mrb[0].mxu0
        %v1142 = vadd.f32 0.0, %v1141
        %v1143 = vpop.f32.mrb[0].mxu0
        %1144 = vmatprep.mubr.f32.mxu0 0.0
        %1145 = vmatmul.mubr.f32.gmra.mrb[0].mxu0 %v613
        %v1146 = vpop.f32.mrb[0].mxu0
        %v1147 = vadd.f32 0.0, %v1146
        %v1148 = vpop.f32.mrb[0].mxu0
        %1149 = vmatprep.mubr.f32.mxu0 0.0
        %1150 = vmatmul.mubr.f32.gmra.mrb[0].mxu0 %v614
        %v1151 = vpop.f32.mrb[0].mxu0
        %v1152 = vadd.f32 0.0, %v1151
        %v1153 = vpop.f32.mrb[0].mxu0
        %1154 = vmatprep.mubr.f32.mxu0 0.0
        %1155 = vmatmul.mubr.f32.gmra.mrb[0].mxu0 %v615
        %v1156 = vpop.f32.mrb[0].mxu0
        %v1157 = vadd.f32 0.0, %v1156
        %v1158 = vpop.f32.mrb[0].mxu0
        %1159 = vmatprep.mubr.f32.mxu0 0.0
        %1160 = vmatmul.mubr.f32.gmra.mrb[0].mxu0 %v616
        %v1161 = vpop.f32.mrb[0].mxu0
        %v1162 = vadd.f32 0.0, %v1161
        %v1163 = vpop.f32.mrb[0].mxu0
        %1164 = vmatprep.mubr.f32.mxu0 0.0
        %1165 = vmatmul.mubr.f32.gmra.mrb[0].mxu0 %v617
        %v1166 = vpop.f32.mrb[0].mxu0
        %v1167 = vadd.f32 0.0, %v1166
        %v1168 = vpop.f32.mrb[0].mxu0
        %1169 = vmatprep.mubr.f32.mxu0 0.0
        %1170 = vmatmul.mubr.f32.gmra.mrb[0].mxu0 %v618
        %v1171 = vpop.f32.mrb[0].mxu0
        %v1172 = vadd.f32 0.0, %v1171
        %v1173 = vpop.f32.mrb[0].mxu0
        %1174 = vmatprep.mubr.f32.mxu0 0.0
        %1175 = vmatmul.mubr.f32.gmra.mrb[0].mxu0 %v619
        %v1176 = vpop.f32.mrb[0].mxu0
        %v1177 = vadd.f32 0.0, %v1176
        %v1178 = vpop.f32.mrb[0].mxu0
        %1179 = vmatprep.mubr.f32.mxu0 0.0
        %1180 = vmatmul.mubr.f32.gmra.mrb[0].mxu0 %v620
        %v1181 = vpop.f32.mrb[0].mxu0
        %v1182 = vadd.f32 0.0, %v1181
        %v1183 = vpop.f32.mrb[0].mxu0
        %1184 = vmatprep.mubr.f32.mxu0 0.0
        %1185 = vmatmul.mubr.f32.gmra.mrb[0].mxu0 %v621
        %v1186 = vpop.f32.mrb[0].mxu0
        %v1187 = vadd.f32 0.0, %v1186
        %v1188 = vpop.f32.mrb[0].mxu0
        %1189 = vmatprep.mubr.f32.mxu0 0.0
        %1190 = vmatmul.mubr.f32.gmra.mrb[0].mxu0 %v622
        %v1191 = vpop.f32.mrb[0].mxu0
        %v1192 = vadd.f32 0.0, %v1191
        %v1193 = vpop.f32.mrb[0].mxu0
        %1194 = vmatprep.mubr.f32.mxu0 0.0
        %1195 = vmatmul.mubr.f32.gmra.mrb[0].mxu0 %v623
        %v1196 = vpop.f32.mrb[0].mxu0
        %v1197 = vadd.f32 0.0, %v1196
        %v1198 = vpop.f32.mrb[0].mxu0
        %1199 = vmatprep.mubr.f32.mxu0 0.0
        %1200 = vmatmul.mubr.f32.gmra.mrb[0].mxu0 %v624
        %v1201 = vpop.f32.mrb[0].mxu0
        %v1202 = vadd.f32 0.0, %v1201
        %v1203 = vpop.f32.mrb[0].mxu0
        %1204 = vdwg.mxu0
        %v1205 = vld [vmem:[#allocation2 + $0xe0] sm:$0xff]
        %v1206 = vld [vmem:[#allocation2 + $0xe8] sm:$0xff]
        %v1207 = vld [vmem:[#allocation2 + $0xf0] sm:$0xff]
        %v1208 = vld [vmem:[#allocation2 + $0xf8] sm:$0xff]
        %v1209 = vadd.f32 %v692, %v1205
        %v1210 = vadd.f32 %v697, %v1206
        %v1211 = vadd.f32 %v702, %v1207
        %v1212 = vadd.f32 %v707, %v1208
        %v1213 = vadd.f32 %v712, %v1205
        %v1214 = vadd.f32 %v717, %v1206
        %v1215 = vadd.f32 %v722, %v1207
        %v1216 = vadd.f32 %v727, %v1208
        %v1217 = vadd.f32 %v732, %v1205
        %v1218 = vadd.f32 %v737, %v1206
        %v1219 = vadd.f32 %v742, %v1207
        %v1220 = vadd.f32 %v747, %v1208
        %v1221 = vadd.f32 %v752, %v1205
        %v1222 = vadd.f32 %v757, %v1206
        %v1223 = vadd.f32 %v762, %v1207
        %v1224 = vadd.f32 %v767, %v1208
        %v1225 = vadd.f32 %v837, %v1205
        %v1226 = vadd.f32 %v842, %v1206
        %v1227 = vadd.f32 %v847, %v1207
        %v1228 = vadd.f32 %v852, %v1208
        %v1229 = vadd.f32 %v857, %v1205
        %v1230 = vadd.f32 %v862, %v1206
        %v1231 = vadd.f32 %v867, %v1207
        %v1232 = vadd.f32 %v872, %v1208
        %v1233 = vadd.f32 %v877, %v1205
        %v1234 = vadd.f32 %v882, %v1206
        %v1235 = vadd.f32 %v887, %v1207
        %v1236 = vadd.f32 %v892, %v1208
        %v1237 = vadd.f32 %v897, %v1205
        %v1238 = vadd.f32 %v902, %v1206
        %v1239 = vadd.f32 %v907, %v1207
        %v1240 = vadd.f32 %v912, %v1208
        %v1241 = vadd.f32 %v982, %v1205
        %v1242 = vadd.f32 %v987, %v1206
        %v1243 = vadd.f32 %v992, %v1207
        %v1244 = vadd.f32 %v997, %v1208
        %v1245 = vadd.f32 %v1002, %v1205
        %v1246 = vadd.f32 %v1007, %v1206
        %v1247 = vadd.f32 %v1012, %v1207
        %v1248 = vadd.f32 %v1017, %v1208
        %v1249 = vadd.f32 %v1022, %v1205
        %v1250 = vadd.f32 %v1027, %v1206
        %v1251 = vadd.f32 %v1032, %v1207
        %v1252 = vadd.f32 %v1037, %v1208
        %v1253 = vadd.f32 %v1042, %v1205
        %v1254 = vadd.f32 %v1047, %v1206
        %v1255 = vadd.f32 %v1052, %v1207
        %v1256 = vadd.f32 %v1057, %v1208
        %v1257 = vadd.f32 %v1127, %v1205
        %v1258 = vadd.f32 %v1132, %v1206
        %v1259 = vadd.f32 %v1137, %v1207
        %v1260 = vadd.f32 %v1142, %v1208
        %v1261 = vadd.f32 %v1147, %v1205
        %v1262 = vadd.f32 %v1152, %v1206
        %v1263 = vadd.f32 %v1157, %v1207
        %v1264 = vadd.f32 %v1162, %v1208
        %v1265 = vadd.f32 %v1167, %v1205
        %v1266 = vadd.f32 %v1172, %v1206
        %v1267 = vadd.f32 %v1177, %v1207
        %v1268 = vadd.f32 %v1182, %v1208
        %v1269 = vadd.f32 %v1187, %v1205
        %v1270 = vadd.f32 %v1192, %v1206
        %v1271 = vadd.f32 %v1197, %v1207
        %v1272 = vadd.f32 %v1202, %v1208
        %v1273 = vmax.f32 %v1209, 0.0
        %v1274 = vmax.f32 %v1210, 0.0
        %v1275 = vmax.f32 %v1211, 0.0
        %v1276 = vmax.f32 %v1212, 0.0
        %v1277 = vmax.f32 %v1213, 0.0
        %v1278 = vmax.f32 %v1214, 0.0
        %v1279 = vmax.f32 %v1215, 0.0
        %v1280 = vmax.f32 %v1216, 0.0
        %v1281 = vmax.f32 %v1217, 0.0
        %v1282 = vmax.f32 %v1218, 0.0
        %v1283 = vmax.f32 %v1219, 0.0
        %v1284 = vmax.f32 %v1220, 0.0
        %v1285 = vmax.f32 %v1221, 0.0
        %v1286 = vmax.f32 %v1222, 0.0
        %v1287 = vmax.f32 %v1223, 0.0
        %v1288 = vmax.f32 %v1224, 0.0
        %v1289 = vmax.f32 %v1225, 0.0
        %v1290 = vmax.f32 %v1226, 0.0
        %v1291 = vmax.f32 %v1227, 0.0
        %v1292 = vmax.f32 %v1228, 0.0
        %v1293 = vmax.f32 %v1229, 0.0
        %v1294 = vmax.f32 %v1230, 0.0
        %v1295 = vmax.f32 %v1231, 0.0
        %v1296 = vmax.f32 %v1232, 0.0
        %v1297 = vmax.f32 %v1233, 0.0
        %v1298 = vmax.f32 %v1234, 0.0
        %v1299 = vmax.f32 %v1235, 0.0
        %v1300 = vmax.f32 %v1236, 0.0
        %v1301 = vmax.f32 %v1237, 0.0
        %v1302 = vmax.f32 %v1238, 0.0
        %v1303 = vmax.f32 %v1239, 0.0
        %v1304 = vmax.f32 %v1240, 0.0
        %v1305 = vmax.f32 %v1241, 0.0
        %v1306 = vmax.f32 %v1242, 0.0
        %v1307 = vmax.f32 %v1243, 0.0
        %v1308 = vmax.f32 %v1244, 0.0
        %v1309 = vmax.f32 %v1245, 0.0
        %v1310 = vmax.f32 %v1246, 0.0
        %v1311 = vmax.f32 %v1247, 0.0
        %v1312 = vmax.f32 %v1248, 0.0
        %v1313 = vmax.f32 %v1249, 0.0
        %v1314 = vmax.f32 %v1250, 0.0
        %v1315 = vmax.f32 %v1251, 0.0
        %v1316 = vmax.f32 %v1252, 0.0
        %v1317 = vmax.f32 %v1253, 0.0
        %v1318 = vmax.f32 %v1254, 0.0
        %v1319 = vmax.f32 %v1255, 0.0
        %v1320 = vmax.f32 %v1256, 0.0
        %v1321 = vmax.f32 %v1257, 0.0
        %v1322 = vmax.f32 %v1258, 0.0
        %v1323 = vmax.f32 %v1259, 0.0
        %v1324 = vmax.f32 %v1260, 0.0
        %v1325 = vmax.f32 %v1261, 0.0
        %v1326 = vmax.f32 %v1262, 0.0
        %v1327 = vmax.f32 %v1263, 0.0
        %v1328 = vmax.f32 %v1264, 0.0
        %v1329 = vmax.f32 %v1265, 0.0
        %v1330 = vmax.f32 %v1266, 0.0
        %v1331 = vmax.f32 %v1267, 0.0
        %v1332 = vmax.f32 %v1268, 0.0
        %v1333 = vmax.f32 %v1269, 0.0
        %v1334 = vmax.f32 %v1270, 0.0
        %v1335 = vmax.f32 %v1271, 0.0
        %v1336 = vmax.f32 %v1272, 0.0
        %v1337 = vld [vmem:[#allocation2 + $0x100] sm:$0xff]
        %v1338 = vld [vmem:[#allocation2 + $0x108] sm:$0xff]
        %v1339 = vld [vmem:[#allocation2 + $0x110] sm:$0xff]
        %v1340 = vld [vmem:[#allocation2 + $0x118] sm:$0xff]
        %v1341 = vmul.f32 %v1273, %v1337
        %v1342 = vmul.f32 %v1274, %v1338
        %v1343 = vmul.f32 %v1275, %v1339
        %v1344 = vmul.f32 %v1276, %v1340
        %v1345 = vmul.f32 %v1277, %v1337
        %v1346 = vmul.f32 %v1278, %v1338
        %v1347 = vmul.f32 %v1279, %v1339
        %v1348 = vmul.f32 %v1280, %v1340
        %v1349 = vmul.f32 %v1281, %v1337
        %v1350 = vmul.f32 %v1282, %v1338
        %v1351 = vmul.f32 %v1283, %v1339
        %v1352 = vmul.f32 %v1284, %v1340
        %v1353 = vmul.f32 %v1285, %v1337
        %v1354 = vmul.f32 %v1286, %v1338
        %v1355 = vmul.f32 %v1287, %v1339
        %v1356 = vmul.f32 %v1288, %v1340
        %v1357 = vmul.f32 %v1289, %v1337
        %v1358 = vmul.f32 %v1290, %v1338
        %v1359 = vmul.f32 %v1291, %v1339
        %v1360 = vmul.f32 %v1292, %v1340
        %v1361 = vmul.f32 %v1293, %v1337
        %v1362 = vmul.f32 %v1294, %v1338
        %v1363 = vmul.f32 %v1295, %v1339
        %v1364 = vmul.f32 %v1296, %v1340
        %v1365 = vmul.f32 %v1297, %v1337
        %v1366 = vmul.f32 %v1298, %v1338
        %v1367 = vmul.f32 %v1299, %v1339
        %v1368 = vmul.f32 %v1300, %v1340
        %v1369 = vmul.f32 %v1301, %v1337
        %v1370 = vmul.f32 %v1302, %v1338
        %v1371 = vmul.f32 %v1303, %v1339
        %v1372 = vmul.f32 %v1304, %v1340
        %v1373 = vmul.f32 %v1305, %v1337
        %v1374 = vmul.f32 %v1306, %v1338
        %v1375 = vmul.f32 %v1307, %v1339
        %v1376 = vmul.f32 %v1308, %v1340
        %v1377 = vmul.f32 %v1309, %v1337
        %v1378 = vmul.f32 %v1310, %v1338
        %v1379 = vmul.f32 %v1311, %v1339
        %v1380 = vmul.f32 %v1312, %v1340
        %v1381 = vmul.f32 %v1313, %v1337
        %v1382 = vmul.f32 %v1314, %v1338
        %v1383 = vmul.f32 %v1315, %v1339
        %v1384 = vmul.f32 %v1316, %v1340
        %v1385 = vmul.f32 %v1317, %v1337
        %v1386 = vmul.f32 %v1318, %v1338
        %v1387 = vmul.f32 %v1319, %v1339
        %v1388 = vmul.f32 %v1320, %v1340
        %v1389 = vmul.f32 %v1321, %v1337
        %v1390 = vmul.f32 %v1322, %v1338
        %v1391 = vmul.f32 %v1323, %v1339
        %v1392 = vmul.f32 %v1324, %v1340
        %v1393 = vmul.f32 %v1325, %v1337
        %v1394 = vmul.f32 %v1326, %v1338
        %v1395 = vmul.f32 %v1327, %v1339
        %v1396 = vmul.f32 %v1328, %v1340
        %v1397 = vmul.f32 %v1329, %v1337
        %v1398 = vmul.f32 %v1330, %v1338
        %v1399 = vmul.f32 %v1331, %v1339
        %v1400 = vmul.f32 %v1332, %v1340
        %v1401 = vmul.f32 %v1333, %v1337
        %v1402 = vmul.f32 %v1334, %v1338
        %v1403 = vmul.f32 %v1335, %v1339
        %v1404 = vmul.f32 %v1336, %v1340
        %v1405 = vadd.f32 %v1341, %v1342
        %v1406 = vadd.f32 %v1405, %v1343
        %v1407 = vadd.f32 %v1406, %v1344
        %v1408 = vrot.slane %v1407, 4
        %v1409 = vadd.f32 %v1407, %v1408
        %v1410 = vrot.slane %v1409, 2
        %v1411 = vadd.f32 %v1409, %v1410
        %v1412 = vrot.slane %v1411, 1
        %v1413 = vadd.f32 %v1411, %v1412
        %v1414 = vadd.f32 %v1345, %v1346
        %v1415 = vadd.f32 %v1414, %v1347
        %v1416 = vadd.f32 %v1415, %v1348
        %v1417 = vrot.slane %v1416, 4
        %v1418 = vadd.f32 %v1416, %v1417
        %v1419 = vrot.slane %v1418, 2
        %v1420 = vadd.f32 %v1418, %v1419
        %v1421 = vrot.slane %v1420, 1
        %v1422 = vadd.f32 %v1420, %v1421
        %v1423 = vadd.f32 %v1349, %v1350
        %v1424 = vadd.f32 %v1423, %v1351
        %v1425 = vadd.f32 %v1424, %v1352
        %v1426 = vrot.slane %v1425, 4
        %v1427 = vadd.f32 %v1425, %v1426
        %v1428 = vrot.slane %v1427, 2
        %v1429 = vadd.f32 %v1427, %v1428
        %v1430 = vrot.slane %v1429, 1
        %v1431 = vadd.f32 %v1429, %v1430
        %v1432 = vadd.f32 %v1353, %v1354
        %v1433 = vadd.f32 %v1432, %v1355
        %v1434 = vadd.f32 %v1433, %v1356
        %v1435 = vrot.slane %v1434, 4
        %v1436 = vadd.f32 %v1434, %v1435
        %v1437 = vrot.slane %v1436, 2
        %v1438 = vadd.f32 %v1436, %v1437
        %v1439 = vrot.slane %v1438, 1
        %v1440 = vadd.f32 %v1438, %v1439
        %v1441 = vadd.f32 %v1357, %v1358
        %v1442 = vadd.f32 %v1441, %v1359
        %v1443 = vadd.f32 %v1442, %v1360
        %v1444 = vrot.slane %v1443, 4
        %v1445 = vadd.f32 %v1443, %v1444
        %v1446 = vrot.slane %v1445, 2
        %v1447 = vadd.f32 %v1445, %v1446
        %v1448 = vrot.slane %v1447, 1
        %v1449 = vadd.f32 %v1447, %v1448
        %v1450 = vadd.f32 %v1361, %v1362
        %v1451 = vadd.f32 %v1450, %v1363
        %v1452 = vadd.f32 %v1451, %v1364
        %v1453 = vrot.slane %v1452, 4
        %v1454 = vadd.f32 %v1452, %v1453
        %v1455 = vrot.slane %v1454, 2
        %v1456 = vadd.f32 %v1454, %v1455
        %v1457 = vrot.slane %v1456, 1
        %v1458 = vadd.f32 %v1456, %v1457
        %v1459 = vadd.f32 %v1365, %v1366
        %v1460 = vadd.f32 %v1459, %v1367
        %v1461 = vadd.f32 %v1460, %v1368
        %v1462 = vrot.slane %v1461, 4
        %v1463 = vadd.f32 %v1461, %v1462
        %v1464 = vrot.slane %v1463, 2
        %v1465 = vadd.f32 %v1463, %v1464
        %v1466 = vrot.slane %v1465, 1
        %v1467 = vadd.f32 %v1465, %v1466
        %v1468 = vadd.f32 %v1369, %v1370
        %v1469 = vadd.f32 %v1468, %v1371
        %v1470 = vadd.f32 %v1469, %v1372
        %v1471 = vrot.slane %v1470, 4
        %v1472 = vadd.f32 %v1470, %v1471
        %v1473 = vrot.slane %v1472, 2
        %v1474 = vadd.f32 %v1472, %v1473
        %v1475 = vrot.slane %v1474, 1
        %v1476 = vadd.f32 %v1474, %v1475
        %v1477 = vadd.f32 %v1373, %v1374
        %v1478 = vadd.f32 %v1477, %v1375
        %v1479 = vadd.f32 %v1478, %v1376
        %v1480 = vrot.slane %v1479, 4
        %v1481 = vadd.f32 %v1479, %v1480
        %v1482 = vrot.slane %v1481, 2
        %v1483 = vadd.f32 %v1481, %v1482
        %v1484 = vrot.slane %v1483, 1
        %v1485 = vadd.f32 %v1483, %v1484
        %v1486 = vadd.f32 %v1377, %v1378
        %v1487 = vadd.f32 %v1486, %v1379
        %v1488 = vadd.f32 %v1487, %v1380
        %v1489 = vrot.slane %v1488, 4
        %v1490 = vadd.f32 %v1488, %v1489
        %v1491 = vrot.slane %v1490, 2
        %v1492 = vadd.f32 %v1490, %v1491
        %v1493 = vrot.slane %v1492, 1
        %v1494 = vadd.f32 %v1492, %v1493
        %v1495 = vadd.f32 %v1381, %v1382
        %v1496 = vadd.f32 %v1495, %v1383
        %v1497 = vadd.f32 %v1496, %v1384
        %v1498 = vrot.slane %v1497, 4
        %v1499 = vadd.f32 %v1497, %v1498
        %v1500 = vrot.slane %v1499, 2
        %v1501 = vadd.f32 %v1499, %v1500
        %v1502 = vrot.slane %v1501, 1
        %v1503 = vadd.f32 %v1501, %v1502
        %v1504 = vadd.f32 %v1385, %v1386
        %v1505 = vadd.f32 %v1504, %v1387
        %v1506 = vadd.f32 %v1505, %v1388
        %v1507 = vrot.slane %v1506, 4
        %v1508 = vadd.f32 %v1506, %v1507
        %v1509 = vrot.slane %v1508, 2
        %v1510 = vadd.f32 %v1508, %v1509
        %v1511 = vrot.slane %v1510, 1
        %v1512 = vadd.f32 %v1510, %v1511
        %v1513 = vadd.f32 %v1389, %v1390
        %v1514 = vadd.f32 %v1513, %v1391
        %v1515 = vadd.f32 %v1514, %v1392
        %v1516 = vrot.slane %v1515, 4
        %v1517 = vadd.f32 %v1515, %v1516
        %v1518 = vrot.slane %v1517, 2
        %v1519 = vadd.f32 %v1517, %v1518
        %v1520 = vrot.slane %v1519, 1
        %v1521 = vadd.f32 %v1519, %v1520
        %v1522 = vadd.f32 %v1393, %v1394
        %v1523 = vadd.f32 %v1522, %v1395
        %v1524 = vadd.f32 %v1523, %v1396
        %v1525 = vrot.slane %v1524, 4
        %v1526 = vadd.f32 %v1524, %v1525
        %v1527 = vrot.slane %v1526, 2
        %v1528 = vadd.f32 %v1526, %v1527
        %v1529 = vrot.slane %v1528, 1
        %v1530 = vadd.f32 %v1528, %v1529
        %v1531 = vadd.f32 %v1397, %v1398
        %v1532 = vadd.f32 %v1531, %v1399
        %v1533 = vadd.f32 %v1532, %v1400
        %v1534 = vrot.slane %v1533, 4
        %v1535 = vadd.f32 %v1533, %v1534
        %v1536 = vrot.slane %v1535, 2
        %v1537 = vadd.f32 %v1535, %v1536
        %v1538 = vrot.slane %v1537, 1
        %v1539 = vadd.f32 %v1537, %v1538
        %v1540 = vadd.f32 %v1401, %v1402
        %v1541 = vadd.f32 %v1540, %v1403
        %v1542 = vadd.f32 %v1541, %v1404
        %v1543 = vrot.slane %v1542, 4
        %v1544 = vadd.f32 %v1542, %v1543
        %v1545 = vrot.slane %v1544, 2
        %v1546 = vadd.f32 %v1544, %v1545
        %v1547 = vrot.slane %v1546, 1
        %v1548 = vadd.f32 %v1546, %v1547
        %v1549 = vld [vmem:[#allocation2 + $0x120] sm:$0x1]
        %v1550 = vlaneseq
        %v1551 = vshrl.u32 %v1550, 7
        %v1552 = vsub.s32 0, %v1551
        %v1553 = vrot.slane %v1549, %v1552
        %v1554 = vadd.f32 %v1413, %v1553
        %v1555 = vadd.f32 %v1422, %v1553
        %v1556 = vadd.f32 %v1431, %v1553
        %v1557 = vadd.f32 %v1440, %v1553
        %v1558 = vadd.f32 %v1449, %v1553
        %v1559 = vadd.f32 %v1458, %v1553
        %v1560 = vadd.f32 %v1467, %v1553
        %v1561 = vadd.f32 %v1476, %v1553
        %v1562 = vadd.f32 %v1485, %v1553
        %v1563 = vadd.f32 %v1494, %v1553
        %v1564 = vadd.f32 %v1503, %v1553
        %v1565 = vadd.f32 %v1512, %v1553
        %v1566 = vadd.f32 %v1521, %v1553
        %v1567 = vadd.f32 %v1530, %v1553
        %v1568 = vadd.f32 %v1539, %v1553
        %v1569 = vadd.f32 %v1548, %v1553
        %v1570 = vmax.f32 %v1554, 0.0
        %v1571 = vmax.f32 %v1555, 0.0
        %v1572 = vmax.f32 %v1556, 0.0
        %v1573 = vmax.f32 %v1557, 0.0
        %v1574 = vmax.f32 %v1558, 0.0
        %v1575 = vmax.f32 %v1559, 0.0
        %v1576 = vmax.f32 %v1560, 0.0
        %v1577 = vmax.f32 %v1561, 0.0
        %v1578 = vmax.f32 %v1562, 0.0
        %v1579 = vmax.f32 %v1563, 0.0
        %v1580 = vmax.f32 %v1564, 0.0
        %v1581 = vmax.f32 %v1565, 0.0
        %v1582 = vmax.f32 %v1566, 0.0
        %v1583 = vmax.f32 %v1567, 0.0
        %v1584 = vmax.f32 %v1568, 0.0
        %v1585 = vmax.f32 %v1569, 0.0
        %v1586 = vand.u32 2147483647, %v1554
        %v1587 = vand.u32 2147483647, %v1555
        %v1588 = vand.u32 2147483647, %v1556
        %v1589 = vand.u32 2147483647, %v1557
        %v1590 = vand.u32 2147483647, %v1558
        %v1591 = vand.u32 2147483647, %v1559
        %v1592 = vand.u32 2147483647, %v1560
        %v1593 = vand.u32 2147483647, %v1561
        %v1594 = vand.u32 2147483647, %v1562
        %v1595 = vand.u32 2147483647, %v1563
        %v1596 = vand.u32 2147483647, %v1564
        %v1597 = vand.u32 2147483647, %v1565
        %v1598 = vand.u32 2147483647, %v1566
        %v1599 = vand.u32 2147483647, %v1567
        %v1600 = vand.u32 2147483647, %v1568
        %v1601 = vand.u32 2147483647, %v1569
        %v1602 = vsub.f32 0.0, %v1586
        %v1603 = vsub.f32 0.0, %v1587
        %v1604 = vsub.f32 0.0, %v1588
        %v1605 = vsub.f32 0.0, %v1589
        %v1606 = vsub.f32 0.0, %v1590
        %v1607 = vsub.f32 0.0, %v1591
        %v1608 = vsub.f32 0.0, %v1592
        %v1609 = vsub.f32 0.0, %v1593
        %v1610 = vsub.f32 0.0, %v1594
        %v1611 = vsub.f32 0.0, %v1595
        %v1612 = vsub.f32 0.0, %v1596
        %v1613 = vsub.f32 0.0, %v1597
        %v1614 = vsub.f32 0.0, %v1598
        %v1615 = vsub.f32 0.0, %v1599
        %v1616 = vsub.f32 0.0, %v1600
        %v1617 = vsub.f32 0.0, %v1601
        %v1618 = vmul.f32 %v1602, 1.442695
        %v1619 = vpow.pop %v1618
        %v1620 = vmul.f32 %v1603, 1.442695
        %v1621 = vpow.pop %v1620
        %v1622 = vmul.f32 %v1604, 1.442695
        %v1623 = vpow.pop %v1622
        %v1624 = vmul.f32 %v1605, 1.442695
        %v1625 = vpow.pop %v1624
        %v1626 = vmul.f32 %v1606, 1.442695
        %v1627 = vpow.pop %v1626
        %v1628 = vmul.f32 %v1607, 1.442695
        %v1629 = vpow.pop %v1628
        %v1630 = vmul.f32 %v1608, 1.442695
        %v1631 = vpow.pop %v1630
        %v1632 = vmul.f32 %v1609, 1.442695
        %v1633 = vpow.pop %v1632
        %v1634 = vmul.f32 %v1610, 1.442695
        %v1635 = vpow.pop %v1634
        %v1636 = vmul.f32 %v1611, 1.442695
        %v1637 = vpow.pop %v1636
        %v1638 = vmul.f32 %v1612, 1.442695
        %v1639 = vpow.pop %v1638
        %v1640 = vmul.f32 %v1613, 1.442695
        %v1641 = vpow.pop %v1640
        %v1642 = vmul.f32 %v1614, 1.442695
        %v1643 = vpow.pop %v1642
        %v1644 = vmul.f32 %v1615, 1.442695
        %v1645 = vpow.pop %v1644
        %v1646 = vmul.f32 %v1616, 1.442695
        %v1647 = vpow.pop %v1646
        %v1648 = vmul.f32 %v1617, 1.442695
        %v1649 = vpow.pop %v1648
        %v1650 = vadd.f32 %v1619, 1.0
        %v1651 = vlog2.pop %v1650
        %v1652 = vmul.f32 %v1651, 0.6931472
        %v1653 = vmul.f32 -0.5, %v1619
        %v1654 = vadd.f32 %v1653, 1.0
        %v1655 = vmul.f32 %v1654, %v1619
        %v1656 = vand.u32 2147483647, %v1619
        %vm1657 = vcmp.lt.f32.partialorder %v1656, 0.0004427343
        %v1658 = vsel %vm1657, %v1655, %v1652
        %v1659 = vadd.f32 %v1621, 1.0
        %v1660 = vlog2.pop %v1659
        %v1661 = vmul.f32 %v1660, 0.6931472
        %v1662 = vmul.f32 -0.5, %v1621
        %v1663 = vadd.f32 %v1662, 1.0
        %v1664 = vmul.f32 %v1663, %v1621
        %v1665 = vand.u32 2147483647, %v1621
        %vm1666 = vcmp.lt.f32.partialorder %v1665, 0.0004427343
        %v1667 = vsel %vm1666, %v1664, %v1661
        %v1668 = vadd.f32 %v1623, 1.0
        %v1669 = vlog2.pop %v1668
        %v1670 = vmul.f32 %v1669, 0.6931472
        %v1671 = vmul.f32 -0.5, %v1623
        %v1672 = vadd.f32 %v1671, 1.0
        %v1673 = vmul.f32 %v1672, %v1623
        %v1674 = vand.u32 2147483647, %v1623
        %vm1675 = vcmp.lt.f32.partialorder %v1674, 0.0004427343
        %v1676 = vsel %vm1675, %v1673, %v1670
        %v1677 = vadd.f32 %v1625, 1.0
        %v1678 = vlog2.pop %v1677
        %v1679 = vmul.f32 %v1678, 0.6931472
        %v1680 = vmul.f32 -0.5, %v1625
        %v1681 = vadd.f32 %v1680, 1.0
        %v1682 = vmul.f32 %v1681, %v1625
        %v1683 = vand.u32 2147483647, %v1625
        %vm1684 = vcmp.lt.f32.partialorder %v1683, 0.0004427343
        %v1685 = vsel %vm1684, %v1682, %v1679
        %v1686 = vadd.f32 %v1627, 1.0
        %v1687 = vlog2.pop %v1686
        %v1688 = vmul.f32 %v1687, 0.6931472
        %v1689 = vmul.f32 -0.5, %v1627
        %v1690 = vadd.f32 %v1689, 1.0
        %v1691 = vmul.f32 %v1690, %v1627
        %v1692 = vand.u32 2147483647, %v1627
        %vm1693 = vcmp.lt.f32.partialorder %v1692, 0.0004427343
        %v1694 = vsel %vm1693, %v1691, %v1688
        %v1695 = vadd.f32 %v1629, 1.0
        %v1696 = vlog2.pop %v1695
        %v1697 = vmul.f32 %v1696, 0.6931472
        %v1698 = vmul.f32 -0.5, %v1629
        %v1699 = vadd.f32 %v1698, 1.0
        %v1700 = vmul.f32 %v1699, %v1629
        %v1701 = vand.u32 2147483647, %v1629
        %vm1702 = vcmp.lt.f32.partialorder %v1701, 0.0004427343
        %v1703 = vsel %vm1702, %v1700, %v1697
        %v1704 = vadd.f32 %v1631, 1.0
        %v1705 = vlog2.pop %v1704
        %v1706 = vmul.f32 %v1705, 0.6931472
        %v1707 = vmul.f32 -0.5, %v1631
        %v1708 = vadd.f32 %v1707, 1.0
        %v1709 = vmul.f32 %v1708, %v1631
        %v1710 = vand.u32 2147483647, %v1631
        %vm1711 = vcmp.lt.f32.partialorder %v1710, 0.0004427343
        %v1712 = vsel %vm1711, %v1709, %v1706
        %v1713 = vadd.f32 %v1633, 1.0
        %v1714 = vlog2.pop %v1713
        %v1715 = vmul.f32 %v1714, 0.6931472
        %v1716 = vmul.f32 -0.5, %v1633
        %v1717 = vadd.f32 %v1716, 1.0
        %v1718 = vmul.f32 %v1717, %v1633
        %v1719 = vand.u32 2147483647, %v1633
        %vm1720 = vcmp.lt.f32.partialorder %v1719, 0.0004427343
        %v1721 = vsel %vm1720, %v1718, %v1715
        %v1722 = vadd.f32 %v1635, 1.0
        %v1723 = vlog2.pop %v1722
        %v1724 = vmul.f32 %v1723, 0.6931472
        %v1725 = vmul.f32 -0.5, %v1635
        %v1726 = vadd.f32 %v1725, 1.0
        %v1727 = vmul.f32 %v1726, %v1635
        %v1728 = vand.u32 2147483647, %v1635
        %vm1729 = vcmp.lt.f32.partialorder %v1728, 0.0004427343
        %v1730 = vsel %vm1729, %v1727, %v1724
        %v1731 = vadd.f32 %v1637, 1.0
        %v1732 = vlog2.pop %v1731
        %v1733 = vmul.f32 %v1732, 0.6931472
        %v1734 = vmul.f32 -0.5, %v1637
        %v1735 = vadd.f32 %v1734, 1.0
        %v1736 = vmul.f32 %v1735, %v1637
        %v1737 = vand.u32 2147483647, %v1637
        %vm1738 = vcmp.lt.f32.partialorder %v1737, 0.0004427343
        %v1739 = vsel %vm1738, %v1736, %v1733
        %v1740 = vadd.f32 %v1639, 1.0
        %v1741 = vlog2.pop %v1740
        %v1742 = vmul.f32 %v1741, 0.6931472
        %v1743 = vmul.f32 -0.5, %v1639
        %v1744 = vadd.f32 %v1743, 1.0
        %v1745 = vmul.f32 %v1744, %v1639
        %v1746 = vand.u32 2147483647, %v1639
        %vm1747 = vcmp.lt.f32.partialorder %v1746, 0.0004427343
        %v1748 = vsel %vm1747, %v1745, %v1742
        %v1749 = vadd.f32 %v1641, 1.0
        %v1750 = vlog2.pop %v1749
        %v1751 = vmul.f32 %v1750, 0.6931472
        %v1752 = vmul.f32 -0.5, %v1641
        %v1753 = vadd.f32 %v1752, 1.0
        %v1754 = vmul.f32 %v1753, %v1641
        %v1755 = vand.u32 2147483647, %v1641
        %vm1756 = vcmp.lt.f32.partialorder %v1755, 0.0004427343
        %v1757 = vsel %vm1756, %v1754, %v1751
        %v1758 = vadd.f32 %v1643, 1.0
        %v1759 = vlog2.pop %v1758
        %v1760 = vmul.f32 %v1759, 0.6931472
        %v1761 = vmul.f32 -0.5, %v1643
        %v1762 = vadd.f32 %v1761, 1.0
        %v1763 = vmul.f32 %v1762, %v1643
        %v1764 = vand.u32 2147483647, %v1643
        %vm1765 = vcmp.lt.f32.partialorder %v1764, 0.0004427343
        %v1766 = vsel %vm1765, %v1763, %v1760
        %v1767 = vadd.f32 %v1645, 1.0
        %v1768 = vlog2.pop %v1767
        %v1769 = vmul.f32 %v1768, 0.6931472
        %v1770 = vmul.f32 -0.5, %v1645
        %v1771 = vadd.f32 %v1770, 1.0
        %v1772 = vmul.f32 %v1771, %v1645
        %v1773 = vand.u32 2147483647, %v1645
        %vm1774 = vcmp.lt.f32.partialorder %v1773, 0.0004427343
        %v1775 = vsel %vm1774, %v1772, %v1769
        %v1776 = vadd.f32 %v1647, 1.0
        %v1777 = vlog2.pop %v1776
        %v1778 = vmul.f32 %v1777, 0.6931472
        %v1779 = vmul.f32 -0.5, %v1647
        %v1780 = vadd.f32 %v1779, 1.0
        %v1781 = vmul.f32 %v1780, %v1647
        %v1782 = vand.u32 2147483647, %v1647
        %vm1783 = vcmp.lt.f32.partialorder %v1782, 0.0004427343
        %v1784 = vsel %vm1783, %v1781, %v1778
        %v1785 = vadd.f32 %v1649, 1.0
        %v1786 = vlog2.pop %v1785
        %v1787 = vmul.f32 %v1786, 0.6931472
        %v1788 = vmul.f32 -0.5, %v1649
        %v1789 = vadd.f32 %v1788, 1.0
        %v1790 = vmul.f32 %v1789, %v1649
        %v1791 = vand.u32 2147483647, %v1649
        %vm1792 = vcmp.lt.f32.partialorder %v1791, 0.0004427343
        %v1793 = vsel %vm1792, %v1790, %v1787
        %v1794 = vadd.f32 %v1570, %v1658
        %v1795 = vadd.f32 %v1571, %v1667
        %v1796 = vadd.f32 %v1572, %v1676
        %v1797 = vadd.f32 %v1573, %v1685
        %v1798 = vadd.f32 %v1574, %v1694
        %v1799 = vadd.f32 %v1575, %v1703
        %v1800 = vadd.f32 %v1576, %v1712
        %v1801 = vadd.f32 %v1577, %v1721
        %v1802 = vadd.f32 %v1578, %v1730
        %v1803 = vadd.f32 %v1579, %v1739
        %v1804 = vadd.f32 %v1580, %v1748
        %v1805 = vadd.f32 %v1581, %v1757
        %v1806 = vadd.f32 %v1582, %v1766
        %v1807 = vadd.f32 %v1583, %v1775
        %v1808 = vadd.f32 %v1584, %v1784
        %v1809 = vadd.f32 %v1585, %v1793
        %v1810 = vld [vmem:[#allocation2 + $0x10] sm:$0xff]
        %v1811 = vld [vmem:[#allocation2 + $0x18] sm:$0xff]
        %v1828 = vrot.slane %v1795, 7
        %vm1829 = vcmask 1041409
        %v1830 = vsel %vm1829, %v1828, %v1794
        %v1831 = vrot.slane %v1796, 6
        %vm1832 = vcmask 1042434
        %v1833 = vsel %vm1832, %v1831, %v1830
        %v1834 = vrot.slane %v1797, 5
        %vm1835 = vcmask 1043459
        %v1836 = vsel %vm1835, %v1834, %v1833
        %v1837 = vrot.slane %v1798, 4
        %vm1838 = vcmask 1044484
        %v1839 = vsel %vm1838, %v1837, %v1836
        %v1840 = vrot.slane %v1799, 3
        %vm1841 = vcmask 1045509
        %v1842 = vsel %vm1841, %v1840, %v1839
        %v1843 = vrot.slane %v1800, 2
        %vm1844 = vcmask 1046534
        %v1845 = vsel %vm1844, %v1843, %v1842
        %v1846 = vrot.slane %v1801, 1
        %vm1847 = vcmask 1047559
        %v1848 = vsel %vm1847, %v1846, %v1845
        %v1849 = vrot.slane %v1803, 7
        %v1850 = vsel %vm1829, %v1849, %v1802
        %v1851 = vrot.slane %v1804, 6
        %v1852 = vsel %vm1832, %v1851, %v1850
        %v1853 = vrot.slane %v1805, 5
        %v1854 = vsel %vm1835, %v1853, %v1852
        %v1855 = vrot.slane %v1806, 4
        %v1856 = vsel %vm1838, %v1855, %v1854
        %v1857 = vrot.slane %v1807, 3
        %v1858 = vsel %vm1841, %v1857, %v1856
        %v1859 = vrot.slane %v1808, 2
        %v1860 = vsel %vm1844, %v1859, %v1858
        %v1861 = vrot.slane %v1809, 1
        %v1862 = vsel %vm1847, %v1861, %v1860
        %v1865 = vmul.f32 %v1810, %v1848
        %v1866 = vmul.f32 %v1811, %v1862
        %v1867 = vadd.f32 %v1865, %v1866
        %v1868 = vrot.slane %v1867, 4
        %v1869 = vadd.f32 %v1867, %v1868
        %v1870 = vrot.slane %v1869, 2
        %v1871 = vadd.f32 %v1869, %v1870
        %v1872 = vrot.slane %v1871, 1
        %v1873 = vadd.f32 %v1871, %v1872
        %v1874 = vmul.f32 %v152, %v1873
        %v1875 = vtanh.pop %v1874
        %1876 = vst [vmem:[%s151] sm:$0x1] %v1875
        %p1877 = scmp.lt.s32.totalorder %s14, 1
        %s1878 = scalar_select %p1877, %s14, 1
        %s1879 = scalar_lea.vmem %s2, %s1878
        // Predicated region
        $region33: #{_lambda_.1} parent=27 // pred_check
          %p1880 = pneg %p79
        $region34: #{_lambda_.1} parent=27 // pred_check_branch
          %1882 = sbr.rel (%p1880) target = $region36
        $region35: #{_lambda_.1} parent=27 // pred_region
          _
        $region36: #{_lambda_.1} parent=27 // pred_fallthru
          _
      $region28: #{_lambda_.1} parent=5 // pred_fallthru
        _
      %p1883 = scmp.le.s32.totalorder 2, %s9
      // Predicated region
      $region37: #{_lambda_.1} parent=5 // pred_check
        %p1884 = pneg %p1883
      $region38: #{_lambda_.1} parent=5 // pred_check_branch
        %1886 = sbr.rel (%p1884) target = $region40
      $region39: #{_lambda_.1} parent=5 // pred_region
        %s1887 = ssub.s32 %s9, 2
        // Predicated region
        $region41: #{_lambda_.1} parent=39 // pred_check
          %p1888 = pneg %p85
        $region42: #{_lambda_.1} parent=39 // pred_check_branch
          %1890 = sbr.rel (%p1888) target = $region44
        $region43: #{_lambda_.1} parent=39 // pred_region
          %p1891 = scmp.lt.s32.totalorder %s15, 1
          %s1892 = scalar_select %p1891, %s15, 1
          %s1893 = scalar_lea.vmem %s2, %s1892
        $region44: #{_lambda_.1} parent=39 // pred_fallthru
          _
      $region40: #{_lambda_.1} parent=5 // pred_fallthru
        _
    $region6: #{_lambda_.1} parent=1 // loop_footer
      %s13 = sadd.s32 1, %s9
    $region7: #{_lambda_.1} parent=1 // loop_footer_branch
      %8 = sbr.rel target = $region3
    $region8: #{_lambda_.1} parent=1 // loop_exit
      _
    %1894 = vsyncpa [#allocation3], 1
    %s1895 = scalar_lea.sflag [#allocation3], 1
    %1896 = vsyncpa %s1895, 1

</llo_original>
